<compile_context>
chip_gen: v5e
topology: v5e:2x2
jax: 0.10.0
libtpu: 0.0.40
codegen_flags: <defaults>
</compile_context>

<pallas_src>
import jax
import jax.numpy as jnp
from jax.experimental import pallas as pl
from jax.experimental.pallas import tpu as pltpu


def crossgate_kernel(x1_ref, x2_ref,
                     w1_ref, b1_ref,
                     w2_ref, b2_ref,
                     wf1_ref, wf2_ref, bf_ref,
                     o_ref):
    # Activations arrive in bf16 (halved HBM traffic); keep elementwise in f32.
    x1 = x1_ref[...]                          # (tm, Dp) bf16 — MXU operand
    x2 = x2_ref[...]
    x1_f32 = x1.astype(jnp.float32)
    x2_f32 = x2.astype(jnp.float32)

    # g1 = sigmoid(x1 @ W1 + b1); h2 = g1 * x2     (bf16 operands, f32 accum)
    g1 = jax.nn.sigmoid(
        jnp.dot(x1, w1_ref[...], preferred_element_type=jnp.float32)
        + b1_ref[...])
    h2 = g1 * x2_f32

    # g2 = sigmoid(x2 @ W2 + b2); h1 = g2 * x1
    g2 = jax.nn.sigmoid(
        jnp.dot(x2, w2_ref[...], preferred_element_type=jnp.float32)
        + b2_ref[...])
    h1 = g2 * x1_f32

    # final(cat([h1, h2], -1)) = h1 @ Wf1 + h2 @ Wf2 + bf
    out = (jnp.dot(h1.astype(jnp.bfloat16), wf1_ref[...],
                   preferred_element_type=jnp.float32)
           + jnp.dot(h2.astype(jnp.bfloat16), wf2_ref[...],
                     preferred_element_type=jnp.float32)
           + bf_ref[...])
    o_ref[...] = out.astype(o_ref.dtype)


def _pad2(a, rows, cols):
    return jnp.pad(a, ((0, rows - a.shape[0]), (0, cols - a.shape[1])))


def cross_gate(x1, x2, params, *, tm=256):
    """x1, x2: (N, D) float32. params: dict of pre-transposed f32 weights/biases.

    The wrapper pads N up to a multiple of tm and D up to a multiple of 128
    (lane-dense blocks), casts matmul operands to bf16, and slices the output
    back to (N, D). Zero padding is exact: padded feature lanes of x are zero,
    so padded lanes of h1/h2 are zero and the zero-padded Wf rows/cols and bias
    contribute nothing to the real output lanes.
    """
    N, D = x1.shape
    Dp = ((D + 127) // 128) * 128          # lane-dense feature dim
    Np = pl.cdiv(N, tm) * tm               # row-padded N (ragged tail handled)
    grid = (Np // tm,)
    # NOTE(v7x): for best 2-TensorCore utilization prefer N such that the grid
    # has an even number of steps; correctness does not depend on it.

    # Activations: bf16 MXU operands.
    x1p = _pad2(x1, Np, Dp).astype(jnp.bfloat16)
    x2p = _pad2(x2, Np, Dp).astype(jnp.bfloat16)
    # Weights: bf16 (halves VMEM / HBM for the 5 resident matrices).
    w1 = _pad2(params["w1"], Dp, Dp).astype(jnp.bfloat16)
    w2 = _pad2(params["w2"], Dp, Dp).astype(jnp.bfloat16)
    wf1 = _pad2(params["wf1"], Dp, Dp).astype(jnp.bfloat16)
    wf2 = _pad2(params["wf2"], Dp, Dp).astype(jnp.bfloat16)
    # Biases stay f32 (added to the f32 accumulator).
    b1 = _pad2(params["b1"], 1, Dp)
    b2 = _pad2(params["b2"], 1, Dp)
    bf = _pad2(params["bf"], 1, Dp)

    row_spec = pl.BlockSpec((tm, Dp), lambda i: (i, 0))
    w_spec = pl.BlockSpec((Dp, Dp), lambda i: (0, 0))   # resident (constant idx)
    b_spec = pl.BlockSpec((1, Dp), lambda i: (0, 0))

    # Advisory cost estimate: 4 matmuls of (Np, Dp) x (Dp, Dp), 2 sigmoids.
    flops = 4 * 2 * Np * Dp * Dp
    transcendentals = 2 * Np * Dp
    bytes_accessed = (2 * Np * Dp * 2        # bf16 activations in
                      + Np * Dp * 4          # f32 output
                      + 5 * Dp * Dp * 2      # bf16 weights
                      + 3 * Dp * 4)          # f32 biases
    cost = pl.CostEstimate(flops=flops, transcendentals=transcendentals,
                           bytes_accessed=bytes_accessed)

    out = pl.pallas_call(
        crossgate_kernel,
        out_shape=jax.ShapeDtypeStruct((Np, Dp), jnp.float32),
        grid_spec=pltpu.PrefetchScalarGridSpec(
            num_scalar_prefetch=0,
            grid=grid,
            in_specs=[row_spec, row_spec,
                      w_spec, b_spec,
                      w_spec, b_spec,
                      w_spec, w_spec, b_spec],
            out_specs=row_spec,
        ),
        compiler_params=pltpu.CompilerParams(
            dimension_semantics=("parallel",),
            vmem_limit_bytes=48 << 20),
        cost_estimate=cost,
    )(x1p, x2p, w1, b1, w2, b2, wf1, wf2, bf)

    return out[:N, :D]


def init_params(key, input_dim):
    """Deterministic synthetic init matching nn.Linear shapes (f32, unpadded).

    PyTorch nn.Linear(in, out) stores weight (out, in); we store transposed
    (in, out) so the kernel does x @ W. The final (2D -> D) weight is split
    into the half multiplying h1 and the half multiplying h2.
    """
    D = input_dim
    k = jax.random.split(key, 6)
    scale = 1.0 / jnp.sqrt(D)
    w1 = jax.random.uniform(k[0], (D, D), jnp.float32, -scale, scale)
    b1 = jax.random.uniform(k[1], (1, D), jnp.float32, -scale, scale)
    w2 = jax.random.uniform(k[2], (D, D), jnp.float32, -scale, scale)
    b2 = jax.random.uniform(k[3], (1, D), jnp.float32, -scale, scale)
    scale_f = 1.0 / jnp.sqrt(2 * D)
    wf = jax.random.uniform(k[4], (2 * D, D), jnp.float32, -scale_f, scale_f)
    bf = jax.random.uniform(k[5], (1, D), jnp.float32, -scale_f, scale_f)
    return {"w1": w1, "b1": b1, "w2": w2, "b2": b2,
            "wf1": wf[:D], "wf2": wf[D:], "bf": bf}


def cross_gate_ref(x1, x2, params):
    """Pure-JAX reference with the same numerics (bf16 operands, f32 accum)."""
    bf16 = jnp.bfloat16
    x1b, x2b = x1.astype(bf16), x2.astype(bf16)
    g1 = jax.nn.sigmoid(
        jnp.dot(x1b, params["w1"].astype(bf16),
                preferred_element_type=jnp.float32) + params["b1"])
    h2 = g1 * x2b.astype(jnp.float32)
    g2 = jax.nn.sigmoid(
        jnp.dot(x2b, params["w2"].astype(bf16),
                preferred_element_type=jnp.float32) + params["b2"])
    h1 = g2 * x1b.astype(jnp.float32)
    return (jnp.dot(h1.astype(bf16), params["wf1"].astype(bf16),
                    preferred_element_type=jnp.float32)
            + jnp.dot(h2.astype(bf16), params["wf2"].astype(bf16),
                      preferred_element_type=jnp.float32)
            + params["bf"])


if __name__ == "__main__":
    batch, seq, hidden = 2, 8, 32
    key = jax.random.PRNGKey(0)
    kx1, kx2, kp = jax.random.split(key, 3)

    x1 = jax.random.normal(kx1, (batch, seq, hidden), jnp.float32)
    x2 = jax.random.normal(kx2, (batch, seq, hidden), jnp.float32)
    params = init_params(kp, hidden)

    # Flatten leading dims (Linear acts on the last axis only).
    x1f = x1.reshape(-1, hidden)
    x2f = x2.reshape(-1, hidden)

    out = cross_gate(x1f, x2f, params, tm=256)
    out = jax.block_until_ready(out).reshape(batch, seq, hidden)

    ref = cross_gate_ref(x1f, x2f, params).reshape(batch, seq, hidden)
    assert out.shape == (batch, seq, hidden)
    assert jnp.allclose(out, ref, atol=1e-3, rtol=1e-3), "mismatch vs JAX reference"
    print("KERNEL_OK")
</pallas_src>

<mosaic_0001>
module attributes {stable_mosaic.version = 11 : i64} {
  func.func @crossgate_kernel(%arg0: i32, %arg1: memref<256x128xbf16, #tpu.memory_space<vmem>>, %arg2: memref<256x128xbf16, #tpu.memory_space<vmem>>, %arg3: memref<128x128xbf16, #tpu.memory_space<vmem>>, %arg4: memref<1x128xf32, #tpu.memory_space<vmem>>, %arg5: memref<128x128xbf16, #tpu.memory_space<vmem>>, %arg6: memref<1x128xf32, #tpu.memory_space<vmem>>, %arg7: memref<128x128xbf16, #tpu.memory_space<vmem>>, %arg8: memref<128x128xbf16, #tpu.memory_space<vmem>>, %arg9: memref<1x128xf32, #tpu.memory_space<vmem>>, %arg10: memref<256x128xf32, #tpu.memory_space<vmem>>) attributes {dimension_semantics = [#tpu.dimension_semantics<parallel>], iteration_bounds = array<i64: 1>, scalar_prefetch = 0 : i64, scratch_operands = 0 : i64, tpu.core_type = #tpu.core_type<tc>, window_params = [{transform_indices = @transform_0, window_bounds = array<i64: 256, 128>}, {transform_indices = @transform_1, window_bounds = array<i64: 256, 128>}, {pipeline_mode = #tpu.pipeline_mode<synchronous>, transform_indices = @transform_2, window_bounds = array<i64: 128, 128>}, {pipeline_mode = #tpu.pipeline_mode<synchronous>, transform_indices = @transform_3, window_bounds = array<i64: 1, 128>}, {pipeline_mode = #tpu.pipeline_mode<synchronous>, transform_indices = @transform_4, window_bounds = array<i64: 128, 128>}, {pipeline_mode = #tpu.pipeline_mode<synchronous>, transform_indices = @transform_5, window_bounds = array<i64: 1, 128>}, {pipeline_mode = #tpu.pipeline_mode<synchronous>, transform_indices = @transform_6, window_bounds = array<i64: 128, 128>}, {pipeline_mode = #tpu.pipeline_mode<synchronous>, transform_indices = @transform_7, window_bounds = array<i64: 128, 128>}, {pipeline_mode = #tpu.pipeline_mode<synchronous>, transform_indices = @transform_8, window_bounds = array<i64: 1, 128>}, {transform_indices = @transform_9, window_bounds = array<i64: 256, 128>}]} {
    %c0 = arith.constant 0 : index
    %c0_0 = arith.constant 0 : index
    %0 = vector.load %arg1[%c0, %c0_0] : memref<256x128xbf16, #tpu.memory_space<vmem>>, vector<256x128xbf16>
    %c0_1 = arith.constant 0 : index
    %c0_2 = arith.constant 0 : index
    %1 = vector.load %arg2[%c0_1, %c0_2] : memref<256x128xbf16, #tpu.memory_space<vmem>>, vector<256x128xbf16>
    %2 = arith.extf %0 : vector<256x128xbf16> to vector<256x128xf32>
    %3 = arith.extf %1 : vector<256x128xbf16> to vector<256x128xf32>
    %c0_3 = arith.constant 0 : index
    %c0_4 = arith.constant 0 : index
    %4 = vector.load %arg3[%c0_3, %c0_4] : memref<128x128xbf16, #tpu.memory_space<vmem>>, vector<128x128xbf16>
    %cst = arith.constant dense<0.000000e+00> : vector<256x128xf32>
    %5 = tpu.matmul %0, %4, %cst {dimension_numbers = #tpu.dot_dimension_numbers<[1], [0], [0], [1], [0, 0, 1, 1], [], []>} : vector<256x128xbf16>, vector<128x128xbf16>, vector<256x128xf32> -> vector<256x128xf32>
    %c0_5 = arith.constant 0 : index
    %c0_6 = arith.constant 0 : index
    %6 = vector.load %arg4[%c0_5, %c0_6] : memref<1x128xf32, #tpu.memory_space<vmem>>, vector<1x128xf32>
    %7 = vector.broadcast %6 : vector<1x128xf32> to vector<256x128xf32>
    %8 = arith.addf %5, %7 : vector<256x128xf32>
    %9 = arith.negf %8 : vector<256x128xf32>
    %10 = math.exp %9 : vector<256x128xf32>
    %cst_7 = arith.constant 1.000000e+00 : f32
    %11 = vector.broadcast %cst_7 : f32 to vector<256x128xf32>
    %12 = arith.addf %11, %10 : vector<256x128xf32>
    %13 = arith.divf %11, %12 : vector<256x128xf32>
    %14 = arith.mulf %13, %3 : vector<256x128xf32>
    %c0_8 = arith.constant 0 : index
    %c0_9 = arith.constant 0 : index
    %15 = vector.load %arg5[%c0_8, %c0_9] : memref<128x128xbf16, #tpu.memory_space<vmem>>, vector<128x128xbf16>
    %cst_10 = arith.constant dense<0.000000e+00> : vector<256x128xf32>
    %16 = tpu.matmul %1, %15, %cst_10 {dimension_numbers = #tpu.dot_dimension_numbers<[1], [0], [0], [1], [0, 0, 1, 1], [], []>} : vector<256x128xbf16>, vector<128x128xbf16>, vector<256x128xf32> -> vector<256x128xf32>
    %c0_11 = arith.constant 0 : index
    %c0_12 = arith.constant 0 : index
    %17 = vector.load %arg6[%c0_11, %c0_12] : memref<1x128xf32, #tpu.memory_space<vmem>>, vector<1x128xf32>
    %18 = vector.broadcast %17 : vector<1x128xf32> to vector<256x128xf32>
    %19 = arith.addf %16, %18 : vector<256x128xf32>
    %20 = arith.negf %19 : vector<256x128xf32>
    %21 = math.exp %20 : vector<256x128xf32>
    %cst_13 = arith.constant 1.000000e+00 : f32
    %22 = vector.broadcast %cst_13 : f32 to vector<256x128xf32>
    %23 = arith.addf %22, %21 : vector<256x128xf32>
    %24 = arith.divf %22, %23 : vector<256x128xf32>
    %25 = arith.mulf %24, %2 : vector<256x128xf32>
    %26 = arith.truncf %25 : vector<256x128xf32> to vector<256x128xbf16>
    %c0_14 = arith.constant 0 : index
    %c0_15 = arith.constant 0 : index
    %27 = vector.load %arg7[%c0_14, %c0_15] : memref<128x128xbf16, #tpu.memory_space<vmem>>, vector<128x128xbf16>
    %cst_16 = arith.constant dense<0.000000e+00> : vector<256x128xf32>
    %28 = tpu.matmul %26, %27, %cst_16 {dimension_numbers = #tpu.dot_dimension_numbers<[1], [0], [0], [1], [0, 0, 1, 1], [], []>} : vector<256x128xbf16>, vector<128x128xbf16>, vector<256x128xf32> -> vector<256x128xf32>
    %29 = arith.truncf %14 : vector<256x128xf32> to vector<256x128xbf16>
    %c0_17 = arith.constant 0 : index
    %c0_18 = arith.constant 0 : index
    %30 = vector.load %arg8[%c0_17, %c0_18] : memref<128x128xbf16, #tpu.memory_space<vmem>>, vector<128x128xbf16>
    %cst_19 = arith.constant dense<0.000000e+00> : vector<256x128xf32>
    %31 = tpu.matmul %29, %30, %cst_19 {dimension_numbers = #tpu.dot_dimension_numbers<[1], [0], [0], [1], [0, 0, 1, 1], [], []>} : vector<256x128xbf16>, vector<128x128xbf16>, vector<256x128xf32> -> vector<256x128xf32>
    %32 = arith.addf %28, %31 : vector<256x128xf32>
    %c0_20 = arith.constant 0 : index
    %c0_21 = arith.constant 0 : index
    %33 = vector.load %arg9[%c0_20, %c0_21] : memref<1x128xf32, #tpu.memory_space<vmem>>, vector<1x128xf32>
    %34 = vector.broadcast %33 : vector<1x128xf32> to vector<256x128xf32>
    %35 = arith.addf %32, %34 : vector<256x128xf32>
    %c0_22 = arith.constant 0 : index
    %c0_23 = arith.constant 0 : index
    %36 = vector.load %arg10[%c0_22, %c0_23] : memref<256x128xf32, #tpu.memory_space<vmem>>, vector<256x128xf32>
    tpu.vector_store %arg10[%c0_22, %c0_23], %35 {strides = array<i32>} : memref<256x128xf32, #tpu.memory_space<vmem>>, vector<256x128xf32>,
    return
  }
  func.func @transform_0(%arg0: i32) -> (i32, i32) {
    %c0_i32 = arith.constant 0 : i32
    %c0_i32_0 = arith.constant 0 : i32
    return %arg0, %c0_i32 : i32, i32
  }
  func.func @transform_1(%arg0: i32) -> (i32, i32) {
    %c0_i32 = arith.constant 0 : i32
    %c0_i32_0 = arith.constant 0 : i32
    return %arg0, %c0_i32 : i32, i32
  }
  func.func @transform_2(%arg0: i32) -> (i32, i32) {
    %c0_i32 = arith.constant 0 : i32
    %c0_i32_0 = arith.constant 0 : i32
    %c0_i32_1 = arith.constant 0 : i32
    return %c0_i32, %c0_i32_0 : i32, i32
  }
  func.func @transform_3(%arg0: i32) -> (i32, i32) {
    %c0_i32 = arith.constant 0 : i32
    %c0_i32_0 = arith.constant 0 : i32
    %c0_i32_1 = arith.constant 0 : i32
    return %c0_i32, %c0_i32_0 : i32, i32
  }
  func.func @transform_4(%arg0: i32) -> (i32, i32) {
    %c0_i32 = arith.constant 0 : i32
    %c0_i32_0 = arith.constant 0 : i32
    %c0_i32_1 = arith.constant 0 : i32
    return %c0_i32, %c0_i32_0 : i32, i32
  }
  func.func @transform_5(%arg0: i32) -> (i32, i32) {
    %c0_i32 = arith.constant 0 : i32
    %c0_i32_0 = arith.constant 0 : i32
    %c0_i32_1 = arith.constant 0 : i32
    return %c0_i32, %c0_i32_0 : i32, i32
  }
  func.func @transform_6(%arg0: i32) -> (i32, i32) {
    %c0_i32 = arith.constant 0 : i32
    %c0_i32_0 = arith.constant 0 : i32
    %c0_i32_1 = arith.constant 0 : i32
    return %c0_i32, %c0_i32_0 : i32, i32
  }
  func.func @transform_7(%arg0: i32) -> (i32, i32) {
    %c0_i32 = arith.constant 0 : i32
    %c0_i32_0 = arith.constant 0 : i32
    %c0_i32_1 = arith.constant 0 : i32
    return %c0_i32, %c0_i32_0 : i32, i32
  }
  func.func @transform_8(%arg0: i32) -> (i32, i32) {
    %c0_i32 = arith.constant 0 : i32
    %c0_i32_0 = arith.constant 0 : i32
    %c0_i32_1 = arith.constant 0 : i32
    return %c0_i32, %c0_i32_0 : i32, i32
  }
  func.func @transform_9(%arg0: i32) -> (i32, i32) {
    %c0_i32 = arith.constant 0 : i32
    %c0_i32_0 = arith.constant 0 : i32
    return %arg0, %c0_i32 : i32, i32
  }
}

</mosaic_0001>

<llo_original>
// kernel: tpu_custom_call.1
$region0: #{tpu_custom_call.1}
  #allocation0 [shape = 'u32[]', space=smem, size = 0x4, offset = 0x4, fixed_abs, tag = 'smem constant byte address 0x4 - core index']
  #allocation1 [shape = 'u32[72,128]{1,0:T(1,128)}', space=vmem, size = 0x9000, scoped, tag = 'internal scratch']
  %s0 = inlined_call_operand.hbm [shape: bf16[256,128], index: 0, kind: input, shape index: {}]
  %s1 = inlined_call_operand.hbm [shape: bf16[256,128], index: 1, kind: input, shape index: {}]
  %s2 = inlined_call_operand.hbm [shape: bf16[128,128], index: 2, kind: input, shape index: {}]
  %s3 = inlined_call_operand.vmem [shape: f32[1,128], index: 3, kind: input, shape index: {}]
  %s4 = inlined_call_operand.hbm [shape: bf16[128,128], index: 4, kind: input, shape index: {}]
  %s5 = inlined_call_operand.vmem [shape: f32[1,128], index: 5, kind: input, shape index: {}]
  %s6 = inlined_call_operand.hbm [shape: bf16[128,128], index: 6, kind: input, shape index: {}]
  %s7 = inlined_call_operand.hbm [shape: bf16[128,128], index: 7, kind: input, shape index: {}]
  %s8 = inlined_call_operand.vmem [shape: f32[1,128], index: 8, kind: input, shape index: {}]
  %s9 = inlined_call_operand.hbm [shape: f32[256,128], index: 9, kind: output, shape index: {}]
  %s10 = sld [smem:[#allocation0]]
  $region70: #{tpu_custom_call.1} parent=0
    _
  %s12 = ssub.s32 1, %s10
  %s13 = scalar_select 0, %s12, %s10
  $region1: #{tpu_custom_call.1} parent=0
    #allocation2 [shape = 'u8[65536]{0}', space=vmem, size = 0x10000, scoped, tag = 'input window, operand 0, single buffered']
    #allocation3 [shape = 's32[1]{0}', space=sflag, size = 0x4, scoped, tag = 'scoped memory for tpu_custom_call.1']
    #allocation4 [shape = 's32[1]{0}', space=sflag, size = 0x4, scoped, tag = 'scoped memory for tpu_custom_call.1']
    #allocation5 [shape = 'u8[65536]{0}', space=vmem, size = 0x10000, scoped, tag = 'input window, operand 1, single buffered']
    #allocation6 [shape = 's32[1]{0}', space=sflag, size = 0x4, scoped, tag = 'scoped memory for tpu_custom_call.1']
    #allocation7 [shape = 'u8[32768]{0}', space=vmem, size = 0x8000, scoped, tag = 'input window, operand 2, single buffered']
    #allocation8 [shape = 'u8[32768]{0}', space=vmem, size = 0x8000, scoped, tag = 'input window, operand 4, single buffered']
    #allocation9 [shape = 's32[1]{0}', space=sflag, size = 0x4, scoped, tag = 'scoped memory for tpu_custom_call.1']
    #allocation10 [shape = 'u8[32768]{0}', space=vmem, size = 0x8000, scoped, tag = 'input window, operand 6, single buffered']
    #allocation11 [shape = 'u8[32768]{0}', space=vmem, size = 0x8000, scoped, tag = 'input window, operand 7, single buffered']
    #allocation12 [shape = 's32[1]{0}', space=sflag, size = 0x4, scoped, tag = 'scoped memory for tpu_custom_call.1']
    #allocation13 [shape = 'u8[131072]{0}', space=vmem, size = 0x20000, scoped, tag = 'output window, operand 0, single buffered']
    %14 = vsyncpa [#allocation3], 0
    %15 = vsyncpa [#allocation6], 0
    %16 = vsyncpa [#allocation9], 0
    %17 = vsyncpa [#allocation12], 0
    %18 = vsyncpa [#allocation4], 0
    // Predicated region
    $region2: #{tpu_custom_call.1} parent=1 // pred_check
      _
    $region3: #{tpu_custom_call.1} parent=1 // pred_check_branch
      %20 = sbr.rel (0) target = $region5
    $region4: #{tpu_custom_call.1} parent=1 // pred_region
      %22 = vsyncadd [#allocation3], 0
      %s23 = sshll.u32 %s0, 4
      %s24 = int_to_ptr.hbm [resolvable:$true] %s23
      %s25 = sshll.u32 [#allocation2], 4
      %s26 = int_to_ptr.vmem [resolvable:$true] %s25
      %31 = dma.hbm_to_vmem [thread:$0]  %s24, 2048, %s26, [#allocation3], 64, 64, 4
    $region5: #{tpu_custom_call.1} parent=1 // pred_fallthru
      _
    // Predicated region
    $region6: #{tpu_custom_call.1} parent=1 // pred_check
      _
    $region7: #{tpu_custom_call.1} parent=1 // pred_check_branch
      %33 = sbr.rel (0) target = $region9
    $region8: #{tpu_custom_call.1} parent=1 // pred_region
      %35 = vsyncadd [#allocation6], 0
      %s36 = sshll.u32 %s1, 4
      %s37 = int_to_ptr.hbm [resolvable:$true] %s36
      %s38 = sshll.u32 [#allocation5], 4
      %s39 = int_to_ptr.vmem [resolvable:$true] %s38
      %44 = dma.hbm_to_vmem [thread:$0]  %s37, 2048, %s39, [#allocation6], 64, 64, 4
    $region9: #{tpu_custom_call.1} parent=1 // pred_fallthru
      _
    // Predicated region
    $region10: #{tpu_custom_call.1} parent=1 // pred_check
      _
    $region11: #{tpu_custom_call.1} parent=1 // pred_check_branch
      %46 = sbr.rel (0) target = $region13
    $region12: #{tpu_custom_call.1} parent=1 // pred_region
      %48 = vsyncadd [#allocation6], 0
      %s49 = sshll.u32 %s2, 4
      %s50 = int_to_ptr.hbm [resolvable:$true] %s49
      %s51 = sshll.u32 [#allocation7], 4
      %s52 = int_to_ptr.vmem [resolvable:$true] %s51
      %57 = dma.hbm_to_vmem [thread:$0]  %s50, 1024, %s52, [#allocation6], 64, 64, 4
    $region13: #{tpu_custom_call.1} parent=1 // pred_fallthru
      _
    // Predicated region
    $region14: #{tpu_custom_call.1} parent=1 // pred_check
      _
    $region15: #{tpu_custom_call.1} parent=1 // pred_check_branch
      %59 = sbr.rel (0) target = $region17
    $region16: #{tpu_custom_call.1} parent=1 // pred_region
      _
    $region17: #{tpu_custom_call.1} parent=1 // pred_fallthru
      _
    // Predicated region
    $region18: #{tpu_custom_call.1} parent=1 // pred_check
      _
    $region19: #{tpu_custom_call.1} parent=1 // pred_check_branch
      %61 = sbr.rel (0) target = $region21
    $region20: #{tpu_custom_call.1} parent=1 // pred_region
      %63 = vsyncadd [#allocation9], 0
      %s64 = sshll.u32 %s4, 4
      %s65 = int_to_ptr.hbm [resolvable:$true] %s64
      %s66 = sshll.u32 [#allocation8], 4
      %s67 = int_to_ptr.vmem [resolvable:$true] %s66
      %72 = dma.hbm_to_vmem [thread:$0]  %s65, 1024, %s67, [#allocation9], 64, 64, 4
    $region21: #{tpu_custom_call.1} parent=1 // pred_fallthru
      _
    // Predicated region
    $region22: #{tpu_custom_call.1} parent=1 // pred_check
      _
    $region23: #{tpu_custom_call.1} parent=1 // pred_check_branch
      %74 = sbr.rel (0) target = $region25
    $region24: #{tpu_custom_call.1} parent=1 // pred_region
      _
    $region25: #{tpu_custom_call.1} parent=1 // pred_fallthru
      _
    // Predicated region
    $region26: #{tpu_custom_call.1} parent=1 // pred_check
      _
    $region27: #{tpu_custom_call.1} parent=1 // pred_check_branch
      %76 = sbr.rel (0) target = $region29
    $region28: #{tpu_custom_call.1} parent=1 // pred_region
      %78 = vsyncadd [#allocation9], 0
      %s79 = sshll.u32 %s6, 4
      %s80 = int_to_ptr.hbm [resolvable:$true] %s79
      %s81 = sshll.u32 [#allocation10], 4
      %s82 = int_to_ptr.vmem [resolvable:$true] %s81
      %87 = dma.hbm_to_vmem [thread:$0]  %s80, 1024, %s82, [#allocation9], 64, 64, 4
    $region29: #{tpu_custom_call.1} parent=1 // pred_fallthru
      _
    // Predicated region
    $region30: #{tpu_custom_call.1} parent=1 // pred_check
      _
    $region31: #{tpu_custom_call.1} parent=1 // pred_check_branch
      %89 = sbr.rel (0) target = $region33
    $region32: #{tpu_custom_call.1} parent=1 // pred_region
      %91 = vsyncadd [#allocation12], 0
      %s92 = sshll.u32 %s7, 4
      %s93 = int_to_ptr.hbm [resolvable:$true] %s92
      %s94 = sshll.u32 [#allocation11], 4
      %s95 = int_to_ptr.vmem [resolvable:$true] %s94
      %100 = dma.hbm_to_vmem [thread:$0]  %s93, 1024, %s95, [#allocation12], 64, 64, 4
    $region33: #{tpu_custom_call.1} parent=1 // pred_fallthru
      _
    // Predicated region
    $region34: #{tpu_custom_call.1} parent=1 // pred_check
      _
    $region35: #{tpu_custom_call.1} parent=1 // pred_check_branch
      %102 = sbr.rel (0) target = $region37
    $region36: #{tpu_custom_call.1} parent=1 // pred_region
      _
    $region37: #{tpu_custom_call.1} parent=1 // pred_fallthru
      _
    // Predicated region
    $region38: #{tpu_custom_call.1} parent=1 // pred_check
      _
    $region39: #{tpu_custom_call.1} parent=1 // pred_check_branch
      %104 = sbr.rel (0) target = $region41
    $region40: #{tpu_custom_call.1} parent=1 // pred_region
      %106 = dma.done [#allocation3], 2048
    $region41: #{tpu_custom_call.1} parent=1 // pred_fallthru
      _
    // Predicated region
    $region42: #{tpu_custom_call.1} parent=1 // pred_check
      _
    $region43: #{tpu_custom_call.1} parent=1 // pred_check_branch
      %108 = sbr.rel (0) target = $region45
    $region44: #{tpu_custom_call.1} parent=1 // pred_region
      %110 = dma.done [#allocation6], 2048
    $region45: #{tpu_custom_call.1} parent=1 // pred_fallthru
      _
    // Predicated region
    $region46: #{tpu_custom_call.1} parent=1 // pred_check
      _
    $region47: #{tpu_custom_call.1} parent=1 // pred_check_branch
      %112 = sbr.rel (0) target = $region49
    $region48: #{tpu_custom_call.1} parent=1 // pred_region
      %114 = dma.done [#allocation6], 1024
    $region49: #{tpu_custom_call.1} parent=1 // pred_fallthru
      _
    // Predicated region
    $region50: #{tpu_custom_call.1} parent=1 // pred_check
      _
    $region51: #{tpu_custom_call.1} parent=1 // pred_check_branch
      %116 = sbr.rel (0) target = $region53
    $region52: #{tpu_custom_call.1} parent=1 // pred_region
      %118 = dma.done [#allocation9], 1024
    $region53: #{tpu_custom_call.1} parent=1 // pred_fallthru
      _
    // Predicated region
    $region54: #{tpu_custom_call.1} parent=1 // pred_check
      _
    $region55: #{tpu_custom_call.1} parent=1 // pred_check_branch
      %120 = sbr.rel (0) target = $region57
    $region56: #{tpu_custom_call.1} parent=1 // pred_region
      %122 = dma.done [#allocation9], 1024
    $region57: #{tpu_custom_call.1} parent=1 // pred_fallthru
      _
    // Predicated region
    $region58: #{tpu_custom_call.1} parent=1 // pred_check
      _
    $region59: #{tpu_custom_call.1} parent=1 // pred_check_branch
      %124 = sbr.rel (0) target = $region61
    $region60: #{tpu_custom_call.1} parent=1 // pred_region
      %126 = dma.done [#allocation12], 1024
    $region61: #{tpu_custom_call.1} parent=1 // pred_fallthru
      _
    %v127 = vld [vmem:[#allocation2] sm:$0xf]
    %v128 = vld [vmem:[#allocation2 + $0x4] sm:$0xf]
    %v129 = vld [vmem:[#allocation2 + $0x8] sm:$0xf]
    %v130 = vld [vmem:[#allocation2 + $0xc] sm:$0xf]
    %v131 = vld [vmem:[#allocation2 + $0x10] sm:$0xf]
    %v132 = vld [vmem:[#allocation2 + $0x14] sm:$0xf]
    %v133 = vld [vmem:[#allocation2 + $0x18] sm:$0xf]
    %v134 = vld [vmem:[#allocation2 + $0x1c] sm:$0xf]
    %v135 = vld [vmem:[#allocation2 + $0x20] sm:$0xf]
    %v136 = vld [vmem:[#allocation2 + $0x24] sm:$0xf]
    %v137 = vld [vmem:[#allocation2 + $0x28] sm:$0xf]
    %v138 = vld [vmem:[#allocation2 + $0x2c] sm:$0xf]
    %v139 = vld [vmem:[#allocation2 + $0x30] sm:$0xf]
    %v140 = vld [vmem:[#allocation2 + $0x34] sm:$0xf]
    %v141 = vld [vmem:[#allocation2 + $0x38] sm:$0xf]
    %v142 = vld [vmem:[#allocation2 + $0x3c] sm:$0xf]
    %v143 = vld [vmem:[#allocation2 + $0x40] sm:$0xf]
    %v144 = vld [vmem:[#allocation2 + $0x44] sm:$0xf]
    %v145 = vld [vmem:[#allocation2 + $0x48] sm:$0xf]
    %v146 = vld [vmem:[#allocation2 + $0x4c] sm:$0xf]
    %v147 = vld [vmem:[#allocation2 + $0x50] sm:$0xf]
    %v148 = vld [vmem:[#allocation2 + $0x54] sm:$0xf]
    %v149 = vld [vmem:[#allocation2 + $0x58] sm:$0xf]
    %v150 = vld [vmem:[#allocation2 + $0x5c] sm:$0xf]
    %v151 = vld [vmem:[#allocation2 + $0x60] sm:$0xf]
    %v152 = vld [vmem:[#allocation2 + $0x64] sm:$0xf]
    %v153 = vld [vmem:[#allocation2 + $0x68] sm:$0xf]
    %v154 = vld [vmem:[#allocation2 + $0x6c] sm:$0xf]
    %v155 = vld [vmem:[#allocation2 + $0x70] sm:$0xf]
    %v156 = vld [vmem:[#allocation2 + $0x74] sm:$0xf]
    %v157 = vld [vmem:[#allocation2 + $0x78] sm:$0xf]
    %v158 = vld [vmem:[#allocation2 + $0x7c] sm:$0xf]
    %v159 = vld [vmem:[#allocation5] sm:$0xf]
    %v160 = vld [vmem:[#allocation5 + $0x4] sm:$0xf]
    %v161 = vld [vmem:[#allocation5 + $0x8] sm:$0xf]
    %v162 = vld [vmem:[#allocation5 + $0xc] sm:$0xf]
    %v163 = vld [vmem:[#allocation5 + $0x10] sm:$0xf]
    %v164 = vld [vmem:[#allocation5 + $0x14] sm:$0xf]
    %v165 = vld [vmem:[#allocation5 + $0x18] sm:$0xf]
    %v166 = vld [vmem:[#allocation5 + $0x1c] sm:$0xf]
    %v167 = vld [vmem:[#allocation5 + $0x20] sm:$0xf]
    %v168 = vld [vmem:[#allocation5 + $0x24] sm:$0xf]
    %v169 = vld [vmem:[#allocation5 + $0x28] sm:$0xf]
    %v170 = vld [vmem:[#allocation5 + $0x2c] sm:$0xf]
    %v171 = vld [vmem:[#allocation5 + $0x30] sm:$0xf]
    %v172 = vld [vmem:[#allocation5 + $0x34] sm:$0xf]
    %v173 = vld [vmem:[#allocation5 + $0x38] sm:$0xf]
    %v174 = vld [vmem:[#allocation5 + $0x3c] sm:$0xf]
    %v175 = vld [vmem:[#allocation5 + $0x40] sm:$0xf]
    %v176 = vld [vmem:[#allocation5 + $0x44] sm:$0xf]
    %v177 = vld [vmem:[#allocation5 + $0x48] sm:$0xf]
    %v178 = vld [vmem:[#allocation5 + $0x4c] sm:$0xf]
    %v179 = vld [vmem:[#allocation5 + $0x50] sm:$0xf]
    %v180 = vld [vmem:[#allocation5 + $0x54] sm:$0xf]
    %v181 = vld [vmem:[#allocation5 + $0x58] sm:$0xf]
    %v182 = vld [vmem:[#allocation5 + $0x5c] sm:$0xf]
    %v183 = vld [vmem:[#allocation5 + $0x60] sm:$0xf]
    %v184 = vld [vmem:[#allocation5 + $0x64] sm:$0xf]
    %v185 = vld [vmem:[#allocation5 + $0x68] sm:$0xf]
    %v186 = vld [vmem:[#allocation5 + $0x6c] sm:$0xf]
    %v187 = vld [vmem:[#allocation5 + $0x70] sm:$0xf]
    %v188 = vld [vmem:[#allocation5 + $0x74] sm:$0xf]
    %v189 = vld [vmem:[#allocation5 + $0x78] sm:$0xf]
    %v190 = vld [vmem:[#allocation5 + $0x7c] sm:$0xf]
    %v191 = vunpack.c.l.bf16 %v127
    %v192 = vunpack.c.l.bf16 %v128
    %v193 = vunpack.c.l.bf16 %v129
    %v194 = vunpack.c.l.bf16 %v130
    %v195 = vunpack.c.l.bf16 %v131
    %v196 = vunpack.c.l.bf16 %v132
    %v197 = vunpack.c.l.bf16 %v133
    %v198 = vunpack.c.l.bf16 %v134
    %v199 = vunpack.c.l.bf16 %v135
    %v200 = vunpack.c.l.bf16 %v136
    %v201 = vunpack.c.l.bf16 %v137
    %v202 = vunpack.c.l.bf16 %v138
    %v203 = vunpack.c.l.bf16 %v139
    %v204 = vunpack.c.l.bf16 %v140
    %v205 = vunpack.c.l.bf16 %v141
    %v206 = vunpack.c.l.bf16 %v142
    %v207 = vunpack.c.l.bf16 %v143
    %v208 = vunpack.c.l.bf16 %v144
    %v209 = vunpack.c.l.bf16 %v145
    %v210 = vunpack.c.l.bf16 %v146
    %v211 = vunpack.c.l.bf16 %v147
    %v212 = vunpack.c.l.bf16 %v148
    %v213 = vunpack.c.l.bf16 %v149
    %v214 = vunpack.c.l.bf16 %v150
    %v215 = vunpack.c.l.bf16 %v151
    %v216 = vunpack.c.l.bf16 %v152
    %v217 = vunpack.c.l.bf16 %v153
    %v218 = vunpack.c.l.bf16 %v154
    %v219 = vunpack.c.l.bf16 %v155
    %v220 = vunpack.c.l.bf16 %v156
    %v221 = vunpack.c.l.bf16 %v157
    %v222 = vunpack.c.l.bf16 %v158
    %v223 = vunpack.c.l.bf16 %v159
    %v224 = vunpack.c.l.bf16 %v160
    %v225 = vunpack.c.l.bf16 %v161
    %v226 = vunpack.c.l.bf16 %v162
    %v227 = vunpack.c.l.bf16 %v163
    %v228 = vunpack.c.l.bf16 %v164
    %v229 = vunpack.c.l.bf16 %v165
    %v230 = vunpack.c.l.bf16 %v166
    %v231 = vunpack.c.l.bf16 %v167
    %v232 = vunpack.c.l.bf16 %v168
    %v233 = vunpack.c.l.bf16 %v169
    %v234 = vunpack.c.l.bf16 %v170
    %v235 = vunpack.c.l.bf16 %v171
    %v236 = vunpack.c.l.bf16 %v172
    %v237 = vunpack.c.l.bf16 %v173
    %v238 = vunpack.c.l.bf16 %v174
    %v239 = vunpack.c.l.bf16 %v175
    %v240 = vunpack.c.l.bf16 %v176
    %v241 = vunpack.c.l.bf16 %v177
    %v242 = vunpack.c.l.bf16 %v178
    %v243 = vunpack.c.l.bf16 %v179
    %v244 = vunpack.c.l.bf16 %v180
    %v245 = vunpack.c.l.bf16 %v181
    %v246 = vunpack.c.l.bf16 %v182
    %v247 = vunpack.c.l.bf16 %v183
    %v248 = vunpack.c.l.bf16 %v184
    %v249 = vunpack.c.l.bf16 %v185
    %v250 = vunpack.c.l.bf16 %v186
    %v251 = vunpack.c.l.bf16 %v187
    %v252 = vunpack.c.l.bf16 %v188
    %v253 = vunpack.c.l.bf16 %v189
    %v254 = vunpack.c.l.bf16 %v190
    %v255 = vld [vmem:[#allocation7] sm:$0xf]
    %v256 = vld [vmem:[#allocation7 + $0x4] sm:$0xf]
    %v257 = vld [vmem:[#allocation7 + $0x8] sm:$0xf]
    %v258 = vld [vmem:[#allocation7 + $0xc] sm:$0xf]
    %v259 = vld [vmem:[#allocation7 + $0x10] sm:$0xf]
    %v260 = vld [vmem:[#allocation7 + $0x14] sm:$0xf]
    %v261 = vld [vmem:[#allocation7 + $0x18] sm:$0xf]
    %v262 = vld [vmem:[#allocation7 + $0x1c] sm:$0xf]
    %v263 = vld [vmem:[#allocation7 + $0x20] sm:$0xf]
    %v264 = vld [vmem:[#allocation7 + $0x24] sm:$0xf]
    %v265 = vld [vmem:[#allocation7 + $0x28] sm:$0xf]
    %v266 = vld [vmem:[#allocation7 + $0x2c] sm:$0xf]
    %v267 = vld [vmem:[#allocation7 + $0x30] sm:$0xf]
    %v268 = vld [vmem:[#allocation7 + $0x34] sm:$0xf]
    %v269 = vld [vmem:[#allocation7 + $0x38] sm:$0xf]
    %v270 = vld [vmem:[#allocation7 + $0x3c] sm:$0xf]
    %v271 = vld [vmem:[%s3] sm:$0x1]
    %v273 = vperm.slane %v271, 0
    %v307 = vunpack.c.l.b16 %v127
    %v308 = vunpack.c.l.b16 %v128
    %v309 = vunpack.c.l.b16 %v129
    %v310 = vunpack.c.l.b16 %v130
    %v311 = vunpack.c.l.b16 %v131
    %v312 = vunpack.c.l.b16 %v132
    %v313 = vunpack.c.l.b16 %v133
    %v314 = vunpack.c.l.b16 %v134
    %v315 = vunpack.c.l.b16 %v135
    %v316 = vunpack.c.l.b16 %v136
    %v317 = vunpack.c.l.b16 %v137
    %v318 = vunpack.c.l.b16 %v138
    %v319 = vunpack.c.l.b16 %v139
    %v320 = vunpack.c.l.b16 %v140
    %v321 = vunpack.c.l.b16 %v141
    %v322 = vunpack.c.l.b16 %v142
    %v323 = vunpack.c.l.b16 %v143
    %v324 = vunpack.c.l.b16 %v144
    %v325 = vunpack.c.l.b16 %v145
    %v326 = vunpack.c.l.b16 %v146
    %v327 = vunpack.c.l.b16 %v147
    %v328 = vunpack.c.l.b16 %v148
    %v329 = vunpack.c.l.b16 %v149
    %v330 = vunpack.c.l.b16 %v150
    %v331 = vunpack.c.l.b16 %v151
    %v332 = vunpack.c.l.b16 %v152
    %v333 = vunpack.c.l.b16 %v153
    %v334 = vunpack.c.l.b16 %v154
    %v335 = vunpack.c.l.b16 %v155
    %v336 = vunpack.c.l.b16 %v156
    %v337 = vunpack.c.l.b16 %v157
    %v338 = vunpack.c.l.b16 %v158
    %v339 = vpack.c.b16 %v308, %v307
    %v340 = vpack.c.b16 %v310, %v309
    %v341 = vpack.c.b16 %v312, %v311
    %v342 = vpack.c.b16 %v314, %v313
    %v343 = vpack.c.b16 %v316, %v315
    %v344 = vpack.c.b16 %v318, %v317
    %v345 = vpack.c.b16 %v320, %v319
    %v346 = vpack.c.b16 %v322, %v321
    %v347 = vpack.c.b16 %v324, %v323
    %v348 = vpack.c.b16 %v326, %v325
    %v349 = vpack.c.b16 %v328, %v327
    %v350 = vpack.c.b16 %v330, %v329
    %v351 = vpack.c.b16 %v332, %v331
    %v352 = vpack.c.b16 %v334, %v333
    %v353 = vpack.c.b16 %v336, %v335
    %v354 = vpack.c.b16 %v338, %v337
    %v387 = vunpack.c.l.b16 %v255
    %v388 = vunpack.c.l.b16 %v256
    %v389 = vunpack.c.l.b16 %v257
    %v390 = vunpack.c.l.b16 %v258
    %v391 = vunpack.c.l.b16 %v259
    %v392 = vunpack.c.l.b16 %v260
    %v393 = vunpack.c.l.b16 %v261
    %v394 = vunpack.c.l.b16 %v262
    %v395 = vunpack.c.l.b16 %v263
    %v396 = vunpack.c.l.b16 %v264
    %v397 = vunpack.c.l.b16 %v265
    %v398 = vunpack.c.l.b16 %v266
    %v399 = vunpack.c.l.b16 %v267
    %v400 = vunpack.c.l.b16 %v268
    %v401 = vunpack.c.l.b16 %v269
    %v402 = vunpack.c.l.b16 %v270
    %v403 = vpack.c.b16 %v388, %v387
    %v404 = vpack.c.b16 %v390, %v389
    %v405 = vpack.c.b16 %v392, %v391
    %v406 = vpack.c.b16 %v394, %v393
    %v407 = vpack.c.b16 %v396, %v395
    %v408 = vpack.c.b16 %v398, %v397
    %v409 = vpack.c.b16 %v400, %v399
    %v410 = vpack.c.b16 %v402, %v401
    %419 = vmatpush.bf16.msra.mxu0 %v410
    %420 = vmatpush.bf16.msra.mxu0 %v409
    %421 = vmatpush.bf16.msra.mxu0 %v408
    %422 = vmatpush.bf16.msra.mxu0 %v407
    %423 = vmatpush.bf16.msra.mxu0 %v406
    %424 = vmatpush.bf16.msra.mxu0 %v405
    %425 = vmatpush.bf16.msra.mxu0 %v404
    %426 = vmatpush.bf16.msra.mxu0 %v403
    %427 = vmatmul.bf16.gmra.mxu0 %v339
    %v428 = vpop.f32.mrf.mxu0
    %v429 = vadd.f32 %v273, %v428
    %v430 = vpop.f32.mrf.mxu0
    %v431 = vadd.f32 %v273, %v430
    %432 = vmatmul.bf16.gmra.mxu0 %v340
    %v433 = vpop.f32.mrf.mxu0
    %v434 = vadd.f32 %v273, %v433
    %v435 = vpop.f32.mrf.mxu0
    %v436 = vadd.f32 %v273, %v435
    %437 = vmatmul.bf16.gmra.mxu0 %v341
    %v438 = vpop.f32.mrf.mxu0
    %v439 = vadd.f32 %v273, %v438
    %v440 = vpop.f32.mrf.mxu0
    %v441 = vadd.f32 %v273, %v440
    %442 = vmatmul.bf16.gmra.mxu0 %v342
    %v443 = vpop.f32.mrf.mxu0
    %v444 = vadd.f32 %v273, %v443
    %v445 = vpop.f32.mrf.mxu0
    %v446 = vadd.f32 %v273, %v445
    %447 = vmatmul.bf16.gmra.mxu0 %v343
    %v448 = vpop.f32.mrf.mxu0
    %v449 = vadd.f32 %v273, %v448
    %v450 = vpop.f32.mrf.mxu0
    %v451 = vadd.f32 %v273, %v450
    %452 = vmatmul.bf16.gmra.mxu0 %v344
    %v453 = vpop.f32.mrf.mxu0
    %v454 = vadd.f32 %v273, %v453
    %v455 = vpop.f32.mrf.mxu0
    %v456 = vadd.f32 %v273, %v455
    %457 = vmatmul.bf16.gmra.mxu0 %v345
    %v458 = vpop.f32.mrf.mxu0
    %v459 = vadd.f32 %v273, %v458
    %v460 = vpop.f32.mrf.mxu0
    %v461 = vadd.f32 %v273, %v460
    %462 = vmatmul.bf16.gmra.mxu0 %v346
    %v463 = vpop.f32.mrf.mxu0
    %v464 = vadd.f32 %v273, %v463
    %v465 = vpop.f32.mrf.mxu0
    %v466 = vadd.f32 %v273, %v465
    %467 = vmatmul.bf16.gmra.mxu0 %v347
    %v468 = vpop.f32.mrf.mxu0
    %v469 = vadd.f32 %v273, %v468
    %v470 = vpop.f32.mrf.mxu0
    %v471 = vadd.f32 %v273, %v470
    %472 = vmatmul.bf16.gmra.mxu0 %v348
    %v473 = vpop.f32.mrf.mxu0
    %v474 = vadd.f32 %v273, %v473
    %v475 = vpop.f32.mrf.mxu0
    %v476 = vadd.f32 %v273, %v475
    %477 = vmatmul.bf16.gmra.mxu0 %v349
    %v478 = vpop.f32.mrf.mxu0
    %v479 = vadd.f32 %v273, %v478
    %v480 = vpop.f32.mrf.mxu0
    %v481 = vadd.f32 %v273, %v480
    %482 = vmatmul.bf16.gmra.mxu0 %v350
    %v483 = vpop.f32.mrf.mxu0
    %v484 = vadd.f32 %v273, %v483
    %v485 = vpop.f32.mrf.mxu0
    %v486 = vadd.f32 %v273, %v485
    %487 = vmatmul.bf16.gmra.mxu0 %v351
    %v488 = vpop.f32.mrf.mxu0
    %v489 = vadd.f32 %v273, %v488
    %v490 = vpop.f32.mrf.mxu0
    %v491 = vadd.f32 %v273, %v490
    %492 = vmatmul.bf16.gmra.mxu0 %v352
    %v493 = vpop.f32.mrf.mxu0
    %v494 = vadd.f32 %v273, %v493
    %v495 = vpop.f32.mrf.mxu0
    %v496 = vadd.f32 %v273, %v495
    %497 = vmatmul.bf16.gmra.mxu0 %v353
    %v498 = vpop.f32.mrf.mxu0
    %v499 = vadd.f32 %v273, %v498
    %v500 = vpop.f32.mrf.mxu0
    %v501 = vadd.f32 %v273, %v500
    %502 = vmatmul.bf16.gmra.mxu0 %v354
    %v503 = vpop.f32.mrf.mxu0
    %v504 = vadd.f32 %v273, %v503
    %v505 = vpop.f32.mrf.mxu0
    %v506 = vadd.f32 %v273, %v505
    %507 = vdwg.mxu0
    %v508 = vxor.u32 %v429, 2147483648
    %v509 = vxor.u32 %v431, 2147483648
    %v510 = vxor.u32 %v434, 2147483648
    %v511 = vxor.u32 %v436, 2147483648
    %v512 = vxor.u32 %v439, 2147483648
    %v513 = vxor.u32 %v441, 2147483648
    %v514 = vxor.u32 %v444, 2147483648
    %v515 = vxor.u32 %v446, 2147483648
    %v516 = vxor.u32 %v449, 2147483648
    %v517 = vxor.u32 %v451, 2147483648
    %v518 = vxor.u32 %v454, 2147483648
    %v519 = vxor.u32 %v456, 2147483648
    %v520 = vxor.u32 %v459, 2147483648
    %v521 = vxor.u32 %v461, 2147483648
    %v522 = vxor.u32 %v464, 2147483648
    %v523 = vxor.u32 %v466, 2147483648
    %v524 = vxor.u32 %v469, 2147483648
    %v525 = vxor.u32 %v471, 2147483648
    %v526 = vxor.u32 %v474, 2147483648
    %v527 = vxor.u32 %v476, 2147483648
    %v528 = vxor.u32 %v479, 2147483648
    %v529 = vxor.u32 %v481, 2147483648
    %v530 = vxor.u32 %v484, 2147483648
    %v531 = vxor.u32 %v486, 2147483648
    %v532 = vxor.u32 %v489, 2147483648
    %v533 = vxor.u32 %v491, 2147483648
    %v534 = vxor.u32 %v494, 2147483648
    %v535 = vxor.u32 %v496, 2147483648
    %v536 = vxor.u32 %v499, 2147483648
    %v537 = vxor.u32 %v501, 2147483648
    %v538 = vxor.u32 %v504, 2147483648
    %v539 = vxor.u32 %v506, 2147483648
    %v540 = vmul.f32 %v508, 1.442695
    %v541 = vpow.pop %v540
    %v542 = vmul.f32 %v509, 1.442695
    %v543 = vpow.pop %v542
    %v544 = vmul.f32 %v510, 1.442695
    %v545 = vpow.pop %v544
    %v546 = vmul.f32 %v511, 1.442695
    %v547 = vpow.pop %v546
    %v548 = vmul.f32 %v512, 1.442695
    %v549 = vpow.pop %v548
    %v550 = vmul.f32 %v513, 1.442695
    %v551 = vpow.pop %v550
    %v552 = vmul.f32 %v514, 1.442695
    %v553 = vpow.pop %v552
    %v554 = vmul.f32 %v515, 1.442695
    %v555 = vpow.pop %v554
    %v556 = vmul.f32 %v516, 1.442695
    %v557 = vpow.pop %v556
    %v558 = vmul.f32 %v517, 1.442695
    %v559 = vpow.pop %v558
    %v560 = vmul.f32 %v518, 1.442695
    %v561 = vpow.pop %v560
    %v562 = vmul.f32 %v519, 1.442695
    %v563 = vpow.pop %v562
    %v564 = vmul.f32 %v520, 1.442695
    %v565 = vpow.pop %v564
    %v566 = vmul.f32 %v521, 1.442695
    %v567 = vpow.pop %v566
    %v568 = vmul.f32 %v522, 1.442695
    %v569 = vpow.pop %v568
    %v570 = vmul.f32 %v523, 1.442695
    %v571 = vpow.pop %v570
    %v572 = vmul.f32 %v524, 1.442695
    %v573 = vpow.pop %v572
    %v574 = vmul.f32 %v525, 1.442695
    %v575 = vpow.pop %v574
    %v576 = vmul.f32 %v526, 1.442695
    %v577 = vpow.pop %v576
    %v578 = vmul.f32 %v527, 1.442695
    %v579 = vpow.pop %v578
    %v580 = vmul.f32 %v528, 1.442695
    %v581 = vpow.pop %v580
    %v582 = vmul.f32 %v529, 1.442695
    %v583 = vpow.pop %v582
    %v584 = vmul.f32 %v530, 1.442695
    %v585 = vpow.pop %v584
    %v586 = vmul.f32 %v531, 1.442695
    %v587 = vpow.pop %v586
    %v588 = vmul.f32 %v532, 1.442695
    %v589 = vpow.pop %v588
    %v590 = vmul.f32 %v533, 1.442695
    %v591 = vpow.pop %v590
    %v592 = vmul.f32 %v534, 1.442695
    %v593 = vpow.pop %v592
    %v594 = vmul.f32 %v535, 1.442695
    %v595 = vpow.pop %v594
    %v596 = vmul.f32 %v536, 1.442695
    %v597 = vpow.pop %v596
    %v598 = vmul.f32 %v537, 1.442695
    %v599 = vpow.pop %v598
    %v600 = vmul.f32 %v538, 1.442695
    %v601 = vpow.pop %v600
    %v602 = vmul.f32 %v539, 1.442695
    %v603 = vpow.pop %v602
    %v604 = vadd.f32 %v541, 1.0
    %v605 = vadd.f32 %v543, 1.0
    %v606 = vadd.f32 %v545, 1.0
    %v607 = vadd.f32 %v547, 1.0
    %v608 = vadd.f32 %v549, 1.0
    %v609 = vadd.f32 %v551, 1.0
    %v610 = vadd.f32 %v553, 1.0
    %v611 = vadd.f32 %v555, 1.0
    %v612 = vadd.f32 %v557, 1.0
    %v613 = vadd.f32 %v559, 1.0
    %v614 = vadd.f32 %v561, 1.0
    %v615 = vadd.f32 %v563, 1.0
    %v616 = vadd.f32 %v565, 1.0
    %v617 = vadd.f32 %v567, 1.0
    %v618 = vadd.f32 %v569, 1.0
    %v619 = vadd.f32 %v571, 1.0
    %v620 = vadd.f32 %v573, 1.0
    %v621 = vadd.f32 %v575, 1.0
    %v622 = vadd.f32 %v577, 1.0
    %v623 = vadd.f32 %v579, 1.0
    %v624 = vadd.f32 %v581, 1.0
    %v625 = vadd.f32 %v583, 1.0
    %v626 = vadd.f32 %v585, 1.0
    %v627 = vadd.f32 %v587, 1.0
    %v628 = vadd.f32 %v589, 1.0
    %v629 = vadd.f32 %v591, 1.0
    %v630 = vadd.f32 %v593, 1.0
    %v631 = vadd.f32 %v595, 1.0
    %v632 = vadd.f32 %v597, 1.0
    %v633 = vadd.f32 %v599, 1.0
    %v634 = vadd.f32 %v601, 1.0
    %v635 = vadd.f32 %v603, 1.0
    %v636 = vrcp.pop %v604
    %v637 = vmul.f32 %v604, %v636
    %v638 = vsub.f32 1.0, %v637
    %v639 = vmul.f32 %v636, %v638
    %v640 = vadd.f32 %v636, %v639
    %vm641 = vweird.f32 %v604
    %vm642 = vweird.f32 %v636
    %vm643 = vmor %vm641, %vm642
    %v644 = vsel %vm643, %v636, %v640
    %v645 = vand.u32 2147483647, %v604
    %vm646 = vcmp.eq.f32.partialorder %v645, 8.507059e+37
    %v647 = vand.u32 %v604, 2147483648
    %v648 = vor.u32 1.1754944e-38, %v647
    %v649 = vsel %vm646, %v648, %v644
    %v650 = vmul.f32 1.0, %v649
    %v651 = vrcp.pop %v605
    %v652 = vmul.f32 %v605, %v651
    %v653 = vsub.f32 1.0, %v652
    %v654 = vmul.f32 %v651, %v653
    %v655 = vadd.f32 %v651, %v654
    %vm656 = vweird.f32 %v605
    %vm657 = vweird.f32 %v651
    %vm658 = vmor %vm656, %vm657
    %v659 = vsel %vm658, %v651, %v655
    %v660 = vand.u32 2147483647, %v605
    %vm661 = vcmp.eq.f32.partialorder %v660, 8.507059e+37
    %v662 = vand.u32 %v605, 2147483648
    %v663 = vor.u32 1.1754944e-38, %v662
    %v664 = vsel %vm661, %v663, %v659
    %v665 = vmul.f32 1.0, %v664
    %v666 = vrcp.pop %v606
    %v667 = vmul.f32 %v606, %v666
    %v668 = vsub.f32 1.0, %v667
    %v669 = vmul.f32 %v666, %v668
    %v670 = vadd.f32 %v666, %v669
    %vm671 = vweird.f32 %v606
    %vm672 = vweird.f32 %v666
    %vm673 = vmor %vm671, %vm672
    %v674 = vsel %vm673, %v666, %v670
    %v675 = vand.u32 2147483647, %v606
    %vm676 = vcmp.eq.f32.partialorder %v675, 8.507059e+37
    %v677 = vand.u32 %v606, 2147483648
    %v678 = vor.u32 1.1754944e-38, %v677
    %v679 = vsel %vm676, %v678, %v674
    %v680 = vmul.f32 1.0, %v679
    %v681 = vrcp.pop %v607
    %v682 = vmul.f32 %v607, %v681
    %v683 = vsub.f32 1.0, %v682
    %v684 = vmul.f32 %v681, %v683
    %v685 = vadd.f32 %v681, %v684
    %vm686 = vweird.f32 %v607
    %vm687 = vweird.f32 %v681
    %vm688 = vmor %vm686, %vm687
    %v689 = vsel %vm688, %v681, %v685
    %v690 = vand.u32 2147483647, %v607
    %vm691 = vcmp.eq.f32.partialorder %v690, 8.507059e+37
    %v692 = vand.u32 %v607, 2147483648
    %v693 = vor.u32 1.1754944e-38, %v692
    %v694 = vsel %vm691, %v693, %v689
    %v695 = vmul.f32 1.0, %v694
    %v696 = vrcp.pop %v608
    %v697 = vmul.f32 %v608, %v696
    %v698 = vsub.f32 1.0, %v697
    %v699 = vmul.f32 %v696, %v698
    %v700 = vadd.f32 %v696, %v699
    %vm701 = vweird.f32 %v608
    %vm702 = vweird.f32 %v696
    %vm703 = vmor %vm701, %vm702
    %v704 = vsel %vm703, %v696, %v700
    %v705 = vand.u32 2147483647, %v608
    %vm706 = vcmp.eq.f32.partialorder %v705, 8.507059e+37
    %v707 = vand.u32 %v608, 2147483648
    %v708 = vor.u32 1.1754944e-38, %v707
    %v709 = vsel %vm706, %v708, %v704
    %v710 = vmul.f32 1.0, %v709
    %v711 = vrcp.pop %v609
    %v712 = vmul.f32 %v609, %v711
    %v713 = vsub.f32 1.0, %v712
    %v714 = vmul.f32 %v711, %v713
    %v715 = vadd.f32 %v711, %v714
    %vm716 = vweird.f32 %v609
    %vm717 = vweird.f32 %v711
    %vm718 = vmor %vm716, %vm717
    %v719 = vsel %vm718, %v711, %v715
    %v720 = vand.u32 2147483647, %v609
    %vm721 = vcmp.eq.f32.partialorder %v720, 8.507059e+37
    %v722 = vand.u32 %v609, 2147483648
    %v723 = vor.u32 1.1754944e-38, %v722
    %v724 = vsel %vm721, %v723, %v719
    %v725 = vmul.f32 1.0, %v724
    %v726 = vrcp.pop %v610
    %v727 = vmul.f32 %v610, %v726
    %v728 = vsub.f32 1.0, %v727
    %v729 = vmul.f32 %v726, %v728
    %v730 = vadd.f32 %v726, %v729
    %vm731 = vweird.f32 %v610
    %vm732 = vweird.f32 %v726
    %vm733 = vmor %vm731, %vm732
    %v734 = vsel %vm733, %v726, %v730
    %v735 = vand.u32 2147483647, %v610
    %vm736 = vcmp.eq.f32.partialorder %v735, 8.507059e+37
    %v737 = vand.u32 %v610, 2147483648
    %v738 = vor.u32 1.1754944e-38, %v737
    %v739 = vsel %vm736, %v738, %v734
    %v740 = vmul.f32 1.0, %v739
    %v741 = vrcp.pop %v611
    %v742 = vmul.f32 %v611, %v741
    %v743 = vsub.f32 1.0, %v742
    %v744 = vmul.f32 %v741, %v743
    %v745 = vadd.f32 %v741, %v744
    %vm746 = vweird.f32 %v611
    %vm747 = vweird.f32 %v741
    %vm748 = vmor %vm746, %vm747
    %v749 = vsel %vm748, %v741, %v745
    %v750 = vand.u32 2147483647, %v611
    %vm751 = vcmp.eq.f32.partialorder %v750, 8.507059e+37
    %v752 = vand.u32 %v611, 2147483648
    %v753 = vor.u32 1.1754944e-38, %v752
    %v754 = vsel %vm751, %v753, %v749
    %v755 = vmul.f32 1.0, %v754
    %v756 = vrcp.pop %v612
    %v757 = vmul.f32 %v612, %v756
    %v758 = vsub.f32 1.0, %v757
    %v759 = vmul.f32 %v756, %v758
    %v760 = vadd.f32 %v756, %v759
    %vm761 = vweird.f32 %v612
    %vm762 = vweird.f32 %v756
    %vm763 = vmor %vm761, %vm762
    %v764 = vsel %vm763, %v756, %v760
    %v765 = vand.u32 2147483647, %v612
    %vm766 = vcmp.eq.f32.partialorder %v765, 8.507059e+37
    %v767 = vand.u32 %v612, 2147483648
    %v768 = vor.u32 1.1754944e-38, %v767
    %v769 = vsel %vm766, %v768, %v764
    %v770 = vmul.f32 1.0, %v769
    %v771 = vrcp.pop %v613
    %v772 = vmul.f32 %v613, %v771
    %v773 = vsub.f32 1.0, %v772
    %v774 = vmul.f32 %v771, %v773
    %v775 = vadd.f32 %v771, %v774
    %vm776 = vweird.f32 %v613
    %vm777 = vweird.f32 %v771
    %vm778 = vmor %vm776, %vm777
    %v779 = vsel %vm778, %v771, %v775
    %v780 = vand.u32 2147483647, %v613
    %vm781 = vcmp.eq.f32.partialorder %v780, 8.507059e+37
    %v782 = vand.u32 %v613, 2147483648
    %v783 = vor.u32 1.1754944e-38, %v782
    %v784 = vsel %vm781, %v783, %v779
    %v785 = vmul.f32 1.0, %v784
    %v786 = vrcp.pop %v614
    %v787 = vmul.f32 %v614, %v786
    %v788 = vsub.f32 1.0, %v787
    %v789 = vmul.f32 %v786, %v788
    %v790 = vadd.f32 %v786, %v789
    %vm791 = vweird.f32 %v614
    %vm792 = vweird.f32 %v786
    %vm793 = vmor %vm791, %vm792
    %v794 = vsel %vm793, %v786, %v790
    %v795 = vand.u32 2147483647, %v614
    %vm796 = vcmp.eq.f32.partialorder %v795, 8.507059e+37
    %v797 = vand.u32 %v614, 2147483648
    %v798 = vor.u32 1.1754944e-38, %v797
    %v799 = vsel %vm796, %v798, %v794
    %v800 = vmul.f32 1.0, %v799
    %v801 = vrcp.pop %v615
    %v802 = vmul.f32 %v615, %v801
    %v803 = vsub.f32 1.0, %v802
    %v804 = vmul.f32 %v801, %v803
    %v805 = vadd.f32 %v801, %v804
    %vm806 = vweird.f32 %v615
    %vm807 = vweird.f32 %v801
    %vm808 = vmor %vm806, %vm807
    %v809 = vsel %vm808, %v801, %v805
    %v810 = vand.u32 2147483647, %v615
    %vm811 = vcmp.eq.f32.partialorder %v810, 8.507059e+37
    %v812 = vand.u32 %v615, 2147483648
    %v813 = vor.u32 1.1754944e-38, %v812
    %v814 = vsel %vm811, %v813, %v809
    %v815 = vmul.f32 1.0, %v814
    %v816 = vrcp.pop %v616
    %v817 = vmul.f32 %v616, %v816
    %v818 = vsub.f32 1.0, %v817
    %v819 = vmul.f32 %v816, %v818
    %v820 = vadd.f32 %v816, %v819
    %vm821 = vweird.f32 %v616
    %vm822 = vweird.f32 %v816
    %vm823 = vmor %vm821, %vm822
    %v824 = vsel %vm823, %v816, %v820
    %v825 = vand.u32 2147483647, %v616
    %vm826 = vcmp.eq.f32.partialorder %v825, 8.507059e+37
    %v827 = vand.u32 %v616, 2147483648
    %v828 = vor.u32 1.1754944e-38, %v827
    %v829 = vsel %vm826, %v828, %v824
    %v830 = vmul.f32 1.0, %v829
    %v831 = vrcp.pop %v617
    %v832 = vmul.f32 %v617, %v831
    %v833 = vsub.f32 1.0, %v832
    %v834 = vmul.f32 %v831, %v833
    %v835 = vadd.f32 %v831, %v834
    %vm836 = vweird.f32 %v617
    %vm837 = vweird.f32 %v831
    %vm838 = vmor %vm836, %vm837
    %v839 = vsel %vm838, %v831, %v835
    %v840 = vand.u32 2147483647, %v617
    %vm841 = vcmp.eq.f32.partialorder %v840, 8.507059e+37
    %v842 = vand.u32 %v617, 2147483648
    %v843 = vor.u32 1.1754944e-38, %v842
    %v844 = vsel %vm841, %v843, %v839
    %v845 = vmul.f32 1.0, %v844
    %v846 = vrcp.pop %v618
    %v847 = vmul.f32 %v618, %v846
    %v848 = vsub.f32 1.0, %v847
    %v849 = vmul.f32 %v846, %v848
    %v850 = vadd.f32 %v846, %v849
    %vm851 = vweird.f32 %v618
    %vm852 = vweird.f32 %v846
    %vm853 = vmor %vm851, %vm852
    %v854 = vsel %vm853, %v846, %v850
    %v855 = vand.u32 2147483647, %v618
    %vm856 = vcmp.eq.f32.partialorder %v855, 8.507059e+37
    %v857 = vand.u32 %v618, 2147483648
    %v858 = vor.u32 1.1754944e-38, %v857
    %v859 = vsel %vm856, %v858, %v854
    %v860 = vmul.f32 1.0, %v859
    %v861 = vrcp.pop %v619
    %v862 = vmul.f32 %v619, %v861
    %v863 = vsub.f32 1.0, %v862
    %v864 = vmul.f32 %v861, %v863
    %v865 = vadd.f32 %v861, %v864
    %vm866 = vweird.f32 %v619
    %vm867 = vweird.f32 %v861
    %vm868 = vmor %vm866, %vm867
    %v869 = vsel %vm868, %v861, %v865
    %v870 = vand.u32 2147483647, %v619
    %vm871 = vcmp.eq.f32.partialorder %v870, 8.507059e+37
    %v872 = vand.u32 %v619, 2147483648
    %v873 = vor.u32 1.1754944e-38, %v872
    %v874 = vsel %vm871, %v873, %v869
    %v875 = vmul.f32 1.0, %v874
    %v876 = vrcp.pop %v620
    %v877 = vmul.f32 %v620, %v876
    %v878 = vsub.f32 1.0, %v877
    %v879 = vmul.f32 %v876, %v878
    %v880 = vadd.f32 %v876, %v879
    %vm881 = vweird.f32 %v620
    %vm882 = vweird.f32 %v876
    %vm883 = vmor %vm881, %vm882
    %v884 = vsel %vm883, %v876, %v880
    %v885 = vand.u32 2147483647, %v620
    %vm886 = vcmp.eq.f32.partialorder %v885, 8.507059e+37
    %v887 = vand.u32 %v620, 2147483648
    %v888 = vor.u32 1.1754944e-38, %v887
    %v889 = vsel %vm886, %v888, %v884
    %v890 = vmul.f32 1.0, %v889
    %v891 = vrcp.pop %v621
    %v892 = vmul.f32 %v621, %v891
    %v893 = vsub.f32 1.0, %v892
    %v894 = vmul.f32 %v891, %v893
    %v895 = vadd.f32 %v891, %v894
    %vm896 = vweird.f32 %v621
    %vm897 = vweird.f32 %v891
    %vm898 = vmor %vm896, %vm897
    %v899 = vsel %vm898, %v891, %v895
    %v900 = vand.u32 2147483647, %v621
    %vm901 = vcmp.eq.f32.partialorder %v900, 8.507059e+37
    %v902 = vand.u32 %v621, 2147483648
    %v903 = vor.u32 1.1754944e-38, %v902
    %v904 = vsel %vm901, %v903, %v899
    %v905 = vmul.f32 1.0, %v904
    %v906 = vrcp.pop %v622
    %v907 = vmul.f32 %v622, %v906
    %v908 = vsub.f32 1.0, %v907
    %v909 = vmul.f32 %v906, %v908
    %v910 = vadd.f32 %v906, %v909
    %vm911 = vweird.f32 %v622
    %vm912 = vweird.f32 %v906
    %vm913 = vmor %vm911, %vm912
    %v914 = vsel %vm913, %v906, %v910
    %v915 = vand.u32 2147483647, %v622
    %vm916 = vcmp.eq.f32.partialorder %v915, 8.507059e+37
    %v917 = vand.u32 %v622, 2147483648
    %v918 = vor.u32 1.1754944e-38, %v917
    %v919 = vsel %vm916, %v918, %v914
    %v920 = vmul.f32 1.0, %v919
    %v921 = vrcp.pop %v623
    %v922 = vmul.f32 %v623, %v921
    %v923 = vsub.f32 1.0, %v922
    %v924 = vmul.f32 %v921, %v923
    %v925 = vadd.f32 %v921, %v924
    %vm926 = vweird.f32 %v623
    %vm927 = vweird.f32 %v921
    %vm928 = vmor %vm926, %vm927
    %v929 = vsel %vm928, %v921, %v925
    %v930 = vand.u32 2147483647, %v623
    %vm931 = vcmp.eq.f32.partialorder %v930, 8.507059e+37
    %v932 = vand.u32 %v623, 2147483648
    %v933 = vor.u32 1.1754944e-38, %v932
    %v934 = vsel %vm931, %v933, %v929
    %v935 = vmul.f32 1.0, %v934
    %v936 = vrcp.pop %v624
    %v937 = vmul.f32 %v624, %v936
    %v938 = vsub.f32 1.0, %v937
    %v939 = vmul.f32 %v936, %v938
    %v940 = vadd.f32 %v936, %v939
    %vm941 = vweird.f32 %v624
    %vm942 = vweird.f32 %v936
    %vm943 = vmor %vm941, %vm942
    %v944 = vsel %vm943, %v936, %v940
    %v945 = vand.u32 2147483647, %v624
    %vm946 = vcmp.eq.f32.partialorder %v945, 8.507059e+37
    %v947 = vand.u32 %v624, 2147483648
    %v948 = vor.u32 1.1754944e-38, %v947
    %v949 = vsel %vm946, %v948, %v944
    %v950 = vmul.f32 1.0, %v949
    %v951 = vrcp.pop %v625
    %v952 = vmul.f32 %v625, %v951
    %v953 = vsub.f32 1.0, %v952
    %v954 = vmul.f32 %v951, %v953
    %v955 = vadd.f32 %v951, %v954
    %vm956 = vweird.f32 %v625
    %vm957 = vweird.f32 %v951
    %vm958 = vmor %vm956, %vm957
    %v959 = vsel %vm958, %v951, %v955
    %v960 = vand.u32 2147483647, %v625
    %vm961 = vcmp.eq.f32.partialorder %v960, 8.507059e+37
    %v962 = vand.u32 %v625, 2147483648
    %v963 = vor.u32 1.1754944e-38, %v962
    %v964 = vsel %vm961, %v963, %v959
    %v965 = vmul.f32 1.0, %v964
    %v966 = vrcp.pop %v626
    %v967 = vmul.f32 %v626, %v966
    %v968 = vsub.f32 1.0, %v967
    %v969 = vmul.f32 %v966, %v968
    %v970 = vadd.f32 %v966, %v969
    %vm971 = vweird.f32 %v626
    %vm972 = vweird.f32 %v966
    %vm973 = vmor %vm971, %vm972
    %v974 = vsel %vm973, %v966, %v970
    %v975 = vand.u32 2147483647, %v626
    %vm976 = vcmp.eq.f32.partialorder %v975, 8.507059e+37
    %v977 = vand.u32 %v626, 2147483648
    %v978 = vor.u32 1.1754944e-38, %v977
    %v979 = vsel %vm976, %v978, %v974
    %v980 = vmul.f32 1.0, %v979
    %v981 = vrcp.pop %v627
    %v982 = vmul.f32 %v627, %v981
    %v983 = vsub.f32 1.0, %v982
    %v984 = vmul.f32 %v981, %v983
    %v985 = vadd.f32 %v981, %v984
    %vm986 = vweird.f32 %v627
    %vm987 = vweird.f32 %v981
    %vm988 = vmor %vm986, %vm987
    %v989 = vsel %vm988, %v981, %v985
    %v990 = vand.u32 2147483647, %v627
    %vm991 = vcmp.eq.f32.partialorder %v990, 8.507059e+37
    %v992 = vand.u32 %v627, 2147483648
    %v993 = vor.u32 1.1754944e-38, %v992
    %v994 = vsel %vm991, %v993, %v989
    %v995 = vmul.f32 1.0, %v994
    %v996 = vrcp.pop %v628
    %v997 = vmul.f32 %v628, %v996
    %v998 = vsub.f32 1.0, %v997
    %v999 = vmul.f32 %v996, %v998
    %v1000 = vadd.f32 %v996, %v999
    %vm1001 = vweird.f32 %v628
    %vm1002 = vweird.f32 %v996
    %vm1003 = vmor %vm1001, %vm1002
    %v1004 = vsel %vm1003, %v996, %v1000
    %v1005 = vand.u32 2147483647, %v628
    %vm1006 = vcmp.eq.f32.partialorder %v1005, 8.507059e+37
    %v1007 = vand.u32 %v628, 2147483648
    %v1008 = vor.u32 1.1754944e-38, %v1007
    %v1009 = vsel %vm1006, %v1008, %v1004
    %v1010 = vmul.f32 1.0, %v1009
    %v1011 = vrcp.pop %v629
    %v1012 = vmul.f32 %v629, %v1011
    %v1013 = vsub.f32 1.0, %v1012
    %v1014 = vmul.f32 %v1011, %v1013
    %v1015 = vadd.f32 %v1011, %v1014
    %vm1016 = vweird.f32 %v629
    %vm1017 = vweird.f32 %v1011
    %vm1018 = vmor %vm1016, %vm1017
    %v1019 = vsel %vm1018, %v1011, %v1015
    %v1020 = vand.u32 2147483647, %v629
    %vm1021 = vcmp.eq.f32.partialorder %v1020, 8.507059e+37
    %v1022 = vand.u32 %v629, 2147483648
    %v1023 = vor.u32 1.1754944e-38, %v1022
    %v1024 = vsel %vm1021, %v1023, %v1019
    %v1025 = vmul.f32 1.0, %v1024
    %v1026 = vrcp.pop %v630
    %v1027 = vmul.f32 %v630, %v1026
    %v1028 = vsub.f32 1.0, %v1027
    %v1029 = vmul.f32 %v1026, %v1028
    %v1030 = vadd.f32 %v1026, %v1029
    %vm1031 = vweird.f32 %v630
    %vm1032 = vweird.f32 %v1026
    %vm1033 = vmor %vm1031, %vm1032
    %v1034 = vsel %vm1033, %v1026, %v1030
    %v1035 = vand.u32 2147483647, %v630
    %vm1036 = vcmp.eq.f32.partialorder %v1035, 8.507059e+37
    %v1037 = vand.u32 %v630, 2147483648
    %v1038 = vor.u32 1.1754944e-38, %v1037
    %v1039 = vsel %vm1036, %v1038, %v1034
    %v1040 = vmul.f32 1.0, %v1039
    %v1041 = vrcp.pop %v631
    %v1042 = vmul.f32 %v631, %v1041
    %v1043 = vsub.f32 1.0, %v1042
    %v1044 = vmul.f32 %v1041, %v1043
    %v1045 = vadd.f32 %v1041, %v1044
    %vm1046 = vweird.f32 %v631
    %vm1047 = vweird.f32 %v1041
    %vm1048 = vmor %vm1046, %vm1047
    %v1049 = vsel %vm1048, %v1041, %v1045
    %v1050 = vand.u32 2147483647, %v631
    %vm1051 = vcmp.eq.f32.partialorder %v1050, 8.507059e+37
    %v1052 = vand.u32 %v631, 2147483648
    %v1053 = vor.u32 1.1754944e-38, %v1052
    %v1054 = vsel %vm1051, %v1053, %v1049
    %v1055 = vmul.f32 1.0, %v1054
    %v1056 = vrcp.pop %v632
    %v1057 = vmul.f32 %v632, %v1056
    %v1058 = vsub.f32 1.0, %v1057
    %v1059 = vmul.f32 %v1056, %v1058
    %v1060 = vadd.f32 %v1056, %v1059
    %vm1061 = vweird.f32 %v632
    %vm1062 = vweird.f32 %v1056
    %vm1063 = vmor %vm1061, %vm1062
    %v1064 = vsel %vm1063, %v1056, %v1060
    %v1065 = vand.u32 2147483647, %v632
    %vm1066 = vcmp.eq.f32.partialorder %v1065, 8.507059e+37
    %v1067 = vand.u32 %v632, 2147483648
    %v1068 = vor.u32 1.1754944e-38, %v1067
    %v1069 = vsel %vm1066, %v1068, %v1064
    %v1070 = vmul.f32 1.0, %v1069
    %v1071 = vrcp.pop %v633
    %v1072 = vmul.f32 %v633, %v1071
    %v1073 = vsub.f32 1.0, %v1072
    %v1074 = vmul.f32 %v1071, %v1073
    %v1075 = vadd.f32 %v1071, %v1074
    %vm1076 = vweird.f32 %v633
    %vm1077 = vweird.f32 %v1071
    %vm1078 = vmor %vm1076, %vm1077
    %v1079 = vsel %vm1078, %v1071, %v1075
    %v1080 = vand.u32 2147483647, %v633
    %vm1081 = vcmp.eq.f32.partialorder %v1080, 8.507059e+37
    %v1082 = vand.u32 %v633, 2147483648
    %v1083 = vor.u32 1.1754944e-38, %v1082
    %v1084 = vsel %vm1081, %v1083, %v1079
    %v1085 = vmul.f32 1.0, %v1084
    %v1086 = vrcp.pop %v634
    %v1087 = vmul.f32 %v634, %v1086
    %v1088 = vsub.f32 1.0, %v1087
    %v1089 = vmul.f32 %v1086, %v1088
    %v1090 = vadd.f32 %v1086, %v1089
    %vm1091 = vweird.f32 %v634
    %vm1092 = vweird.f32 %v1086
    %vm1093 = vmor %vm1091, %vm1092
    %v1094 = vsel %vm1093, %v1086, %v1090
    %v1095 = vand.u32 2147483647, %v634
    %vm1096 = vcmp.eq.f32.partialorder %v1095, 8.507059e+37
    %v1097 = vand.u32 %v634, 2147483648
    %v1098 = vor.u32 1.1754944e-38, %v1097
    %v1099 = vsel %vm1096, %v1098, %v1094
    %v1100 = vmul.f32 1.0, %v1099
    %v1101 = vrcp.pop %v635
    %v1102 = vmul.f32 %v635, %v1101
    %v1103 = vsub.f32 1.0, %v1102
    %v1104 = vmul.f32 %v1101, %v1103
    %v1105 = vadd.f32 %v1101, %v1104
    %vm1106 = vweird.f32 %v635
    %vm1107 = vweird.f32 %v1101
    %vm1108 = vmor %vm1106, %vm1107
    %v1109 = vsel %vm1108, %v1101, %v1105
    %v1110 = vand.u32 2147483647, %v635
    %vm1111 = vcmp.eq.f32.partialorder %v1110, 8.507059e+37
    %v1112 = vand.u32 %v635, 2147483648
    %v1113 = vor.u32 1.1754944e-38, %v1112
    %v1114 = vsel %vm1111, %v1113, %v1109
    %v1115 = vmul.f32 1.0, %v1114
    %v1116 = vmul.f32 %v650, %v223
    %v1117 = vmul.f32 %v665, %v224
    %v1118 = vmul.f32 %v680, %v225
    %v1119 = vmul.f32 %v695, %v226
    %v1120 = vmul.f32 %v710, %v227
    %v1121 = vmul.f32 %v725, %v228
    %v1122 = vmul.f32 %v740, %v229
    %v1123 = vmul.f32 %v755, %v230
    %v1124 = vmul.f32 %v770, %v231
    %v1125 = vmul.f32 %v785, %v232
    %v1126 = vmul.f32 %v800, %v233
    %v1127 = vmul.f32 %v815, %v234
    %v1128 = vmul.f32 %v830, %v235
    %v1129 = vmul.f32 %v845, %v236
    %v1130 = vmul.f32 %v860, %v237
    %v1131 = vmul.f32 %v875, %v238
    %v1132 = vmul.f32 %v890, %v239
    %v1133 = vmul.f32 %v905, %v240
    %v1134 = vmul.f32 %v920, %v241
    %v1135 = vmul.f32 %v935, %v242
    %v1136 = vmul.f32 %v950, %v243
    %v1137 = vmul.f32 %v965, %v244
    %v1138 = vmul.f32 %v980, %v245
    %v1139 = vmul.f32 %v995, %v246
    %v1140 = vmul.f32 %v1010, %v247
    %v1141 = vmul.f32 %v1025, %v248
    %v1142 = vmul.f32 %v1040, %v249
    %v1143 = vmul.f32 %v1055, %v250
    %v1144 = vmul.f32 %v1070, %v251
    %v1145 = vmul.f32 %v1085, %v252
    %v1146 = vmul.f32 %v1100, %v253
    %v1147 = vmul.f32 %v1115, %v254
    %v1148 = vld [vmem:[#allocation8] sm:$0xf]
    %v1149 = vld [vmem:[#allocation8 + $0x4] sm:$0xf]
    %v1150 = vld [vmem:[#allocation8 + $0x8] sm:$0xf]
    %v1151 = vld [vmem:[#allocation8 + $0xc] sm:$0xf]
    %v1152 = vld [vmem:[#allocation8 + $0x10] sm:$0xf]
    %v1153 = vld [vmem:[#allocation8 + $0x14] sm:$0xf]
    %v1154 = vld [vmem:[#allocation8 + $0x18] sm:$0xf]
    %v1155 = vld [vmem:[#allocation8 + $0x1c] sm:$0xf]
    %v1156 = vld [vmem:[#allocation8 + $0x20] sm:$0xf]
    %v1157 = vld [vmem:[#allocation8 + $0x24] sm:$0xf]
    %v1158 = vld [vmem:[#allocation8 + $0x28] sm:$0xf]
    %v1159 = vld [vmem:[#allocation8 + $0x2c] sm:$0xf]
    %v1160 = vld [vmem:[#allocation8 + $0x30] sm:$0xf]
    %v1161 = vld [vmem:[#allocation8 + $0x34] sm:$0xf]
    %v1162 = vld [vmem:[#allocation8 + $0x38] sm:$0xf]
    %v1163 = vld [vmem:[#allocation8 + $0x3c] sm:$0xf]
    %v1164 = vld [vmem:[%s5] sm:$0x1]
    %v1166 = vperm.slane %v1164, 0
    %v1200 = vunpack.c.l.b16 %v159
    %v1201 = vunpack.c.l.b16 %v160
    %v1202 = vunpack.c.l.b16 %v161
    %v1203 = vunpack.c.l.b16 %v162
    %v1204 = vunpack.c.l.b16 %v163
    %v1205 = vunpack.c.l.b16 %v164
    %v1206 = vunpack.c.l.b16 %v165
    %v1207 = vunpack.c.l.b16 %v166
    %v1208 = vunpack.c.l.b16 %v167
    %v1209 = vunpack.c.l.b16 %v168
    %v1210 = vunpack.c.l.b16 %v169
    %v1211 = vunpack.c.l.b16 %v170
    %v1212 = vunpack.c.l.b16 %v171
    %v1213 = vunpack.c.l.b16 %v172
    %v1214 = vunpack.c.l.b16 %v173
    %v1215 = vunpack.c.l.b16 %v174
    %v1216 = vunpack.c.l.b16 %v175
    %v1217 = vunpack.c.l.b16 %v176
    %v1218 = vunpack.c.l.b16 %v177
    %v1219 = vunpack.c.l.b16 %v178
    %v1220 = vunpack.c.l.b16 %v179
    %v1221 = vunpack.c.l.b16 %v180
    %v1222 = vunpack.c.l.b16 %v181
    %v1223 = vunpack.c.l.b16 %v182
    %v1224 = vunpack.c.l.b16 %v183
    %v1225 = vunpack.c.l.b16 %v184
    %v1226 = vunpack.c.l.b16 %v185
    %v1227 = vunpack.c.l.b16 %v186
    %v1228 = vunpack.c.l.b16 %v187
    %v1229 = vunpack.c.l.b16 %v188
    %v1230 = vunpack.c.l.b16 %v189
    %v1231 = vunpack.c.l.b16 %v190
    %v1232 = vpack.c.b16 %v1201, %v1200
    %v1233 = vpack.c.b16 %v1203, %v1202
    %v1234 = vpack.c.b16 %v1205, %v1204
    %v1235 = vpack.c.b16 %v1207, %v1206
    %v1236 = vpack.c.b16 %v1209, %v1208
    %v1237 = vpack.c.b16 %v1211, %v1210
    %v1238 = vpack.c.b16 %v1213, %v1212
    %v1239 = vpack.c.b16 %v1215, %v1214
    %v1240 = vpack.c.b16 %v1217, %v1216
    %v1241 = vpack.c.b16 %v1219, %v1218
    %v1242 = vpack.c.b16 %v1221, %v1220
    %v1243 = vpack.c.b16 %v1223, %v1222
    %v1244 = vpack.c.b16 %v1225, %v1224
    %v1245 = vpack.c.b16 %v1227, %v1226
    %v1246 = vpack.c.b16 %v1229, %v1228
    %v1247 = vpack.c.b16 %v1231, %v1230
    %v1280 = vunpack.c.l.b16 %v1148
    %v1281 = vunpack.c.l.b16 %v1149
    %v1282 = vunpack.c.l.b16 %v1150
    %v1283 = vunpack.c.l.b16 %v1151
    %v1284 = vunpack.c.l.b16 %v1152
    %v1285 = vunpack.c.l.b16 %v1153
    %v1286 = vunpack.c.l.b16 %v1154
    %v1287 = vunpack.c.l.b16 %v1155
    %v1288 = vunpack.c.l.b16 %v1156
    %v1289 = vunpack.c.l.b16 %v1157
    %v1290 = vunpack.c.l.b16 %v1158
    %v1291 = vunpack.c.l.b16 %v1159
    %v1292 = vunpack.c.l.b16 %v1160
    %v1293 = vunpack.c.l.b16 %v1161
    %v1294 = vunpack.c.l.b16 %v1162
    %v1295 = vunpack.c.l.b16 %v1163
    %v1296 = vpack.c.b16 %v1281, %v1280
    %v1297 = vpack.c.b16 %v1283, %v1282
    %v1298 = vpack.c.b16 %v1285, %v1284
    %v1299 = vpack.c.b16 %v1287, %v1286
    %v1300 = vpack.c.b16 %v1289, %v1288
    %v1301 = vpack.c.b16 %v1291, %v1290
    %v1302 = vpack.c.b16 %v1293, %v1292
    %v1303 = vpack.c.b16 %v1295, %v1294
    %1312 = vmatpush.bf16.msra.mxu0 %v1303
    %1313 = vmatpush.bf16.msra.mxu0 %v1302
    %1314 = vmatpush.bf16.msra.mxu0 %v1301
    %1315 = vmatpush.bf16.msra.mxu0 %v1300
    %1316 = vmatpush.bf16.msra.mxu0 %v1299
    %1317 = vmatpush.bf16.msra.mxu0 %v1298
    %1318 = vmatpush.bf16.msra.mxu0 %v1297
    %1319 = vmatpush.bf16.msra.mxu0 %v1296
    %1320 = vmatmul.bf16.gmra.mxu0 %v1232
    %v1321 = vpop.f32.mrf.mxu0
    %v1322 = vadd.f32 %v1166, %v1321
    %v1323 = vpop.f32.mrf.mxu0
    %v1324 = vadd.f32 %v1166, %v1323
    %1325 = vmatmul.bf16.gmra.mxu0 %v1233
    %v1326 = vpop.f32.mrf.mxu0
    %v1327 = vadd.f32 %v1166, %v1326
    %v1328 = vpop.f32.mrf.mxu0
    %v1329 = vadd.f32 %v1166, %v1328
    %1330 = vmatmul.bf16.gmra.mxu0 %v1234
    %v1331 = vpop.f32.mrf.mxu0
    %v1332 = vadd.f32 %v1166, %v1331
    %v1333 = vpop.f32.mrf.mxu0
    %v1334 = vadd.f32 %v1166, %v1333
    %1335 = vmatmul.bf16.gmra.mxu0 %v1235
    %v1336 = vpop.f32.mrf.mxu0
    %v1337 = vadd.f32 %v1166, %v1336
    %v1338 = vpop.f32.mrf.mxu0
    %v1339 = vadd.f32 %v1166, %v1338
    %1340 = vmatmul.bf16.gmra.mxu0 %v1236
    %v1341 = vpop.f32.mrf.mxu0
    %v1342 = vadd.f32 %v1166, %v1341
    %v1343 = vpop.f32.mrf.mxu0
    %v1344 = vadd.f32 %v1166, %v1343
    %1345 = vmatmul.bf16.gmra.mxu0 %v1237
    %v1346 = vpop.f32.mrf.mxu0
    %v1347 = vadd.f32 %v1166, %v1346
    %v1348 = vpop.f32.mrf.mxu0
    %v1349 = vadd.f32 %v1166, %v1348
    %1350 = vmatmul.bf16.gmra.mxu0 %v1238
    %v1351 = vpop.f32.mrf.mxu0
    %v1352 = vadd.f32 %v1166, %v1351
    %v1353 = vpop.f32.mrf.mxu0
    %v1354 = vadd.f32 %v1166, %v1353
    %1355 = vmatmul.bf16.gmra.mxu0 %v1239
    %v1356 = vpop.f32.mrf.mxu0
    %v1357 = vadd.f32 %v1166, %v1356
    %v1358 = vpop.f32.mrf.mxu0
    %v1359 = vadd.f32 %v1166, %v1358
    %1360 = vmatmul.bf16.gmra.mxu0 %v1240
    %v1361 = vpop.f32.mrf.mxu0
    %v1362 = vadd.f32 %v1166, %v1361
    %v1363 = vpop.f32.mrf.mxu0
    %v1364 = vadd.f32 %v1166, %v1363
    %1365 = vmatmul.bf16.gmra.mxu0 %v1241
    %v1366 = vpop.f32.mrf.mxu0
    %v1367 = vadd.f32 %v1166, %v1366
    %v1368 = vpop.f32.mrf.mxu0
    %v1369 = vadd.f32 %v1166, %v1368
    %1370 = vmatmul.bf16.gmra.mxu0 %v1242
    %v1371 = vpop.f32.mrf.mxu0
    %v1372 = vadd.f32 %v1166, %v1371
    %v1373 = vpop.f32.mrf.mxu0
    %v1374 = vadd.f32 %v1166, %v1373
    %1375 = vmatmul.bf16.gmra.mxu0 %v1243
    %v1376 = vpop.f32.mrf.mxu0
    %v1377 = vadd.f32 %v1166, %v1376
    %v1378 = vpop.f32.mrf.mxu0
    %v1379 = vadd.f32 %v1166, %v1378
    %1380 = vmatmul.bf16.gmra.mxu0 %v1244
    %v1381 = vpop.f32.mrf.mxu0
    %v1382 = vadd.f32 %v1166, %v1381
    %v1383 = vpop.f32.mrf.mxu0
    %v1384 = vadd.f32 %v1166, %v1383
    %1385 = vmatmul.bf16.gmra.mxu0 %v1245
    %v1386 = vpop.f32.mrf.mxu0
    %v1387 = vadd.f32 %v1166, %v1386
    %v1388 = vpop.f32.mrf.mxu0
    %v1389 = vadd.f32 %v1166, %v1388
    %1390 = vmatmul.bf16.gmra.mxu0 %v1246
    %v1391 = vpop.f32.mrf.mxu0
    %v1392 = vadd.f32 %v1166, %v1391
    %v1393 = vpop.f32.mrf.mxu0
    %v1394 = vadd.f32 %v1166, %v1393
    %1395 = vmatmul.bf16.gmra.mxu0 %v1247
    %v1396 = vpop.f32.mrf.mxu0
    %v1397 = vadd.f32 %v1166, %v1396
    %v1398 = vpop.f32.mrf.mxu0
    %v1399 = vadd.f32 %v1166, %v1398
    %1400 = vdwg.mxu0
    %v1401 = vxor.u32 %v1322, 2147483648
    %v1402 = vxor.u32 %v1324, 2147483648
    %v1403 = vxor.u32 %v1327, 2147483648
    %v1404 = vxor.u32 %v1329, 2147483648
    %v1405 = vxor.u32 %v1332, 2147483648
    %v1406 = vxor.u32 %v1334, 2147483648
    %v1407 = vxor.u32 %v1337, 2147483648
    %v1408 = vxor.u32 %v1339, 2147483648
    %v1409 = vxor.u32 %v1342, 2147483648
    %v1410 = vxor.u32 %v1344, 2147483648
    %v1411 = vxor.u32 %v1347, 2147483648
    %v1412 = vxor.u32 %v1349, 2147483648
    %v1413 = vxor.u32 %v1352, 2147483648
    %v1414 = vxor.u32 %v1354, 2147483648
    %v1415 = vxor.u32 %v1357, 2147483648
    %v1416 = vxor.u32 %v1359, 2147483648
    %v1417 = vxor.u32 %v1362, 2147483648
    %v1418 = vxor.u32 %v1364, 2147483648
    %v1419 = vxor.u32 %v1367, 2147483648
    %v1420 = vxor.u32 %v1369, 2147483648
    %v1421 = vxor.u32 %v1372, 2147483648
    %v1422 = vxor.u32 %v1374, 2147483648
    %v1423 = vxor.u32 %v1377, 2147483648
    %v1424 = vxor.u32 %v1379, 2147483648
    %v1425 = vxor.u32 %v1382, 2147483648
    %v1426 = vxor.u32 %v1384, 2147483648
    %v1427 = vxor.u32 %v1387, 2147483648
    %v1428 = vxor.u32 %v1389, 2147483648
    %v1429 = vxor.u32 %v1392, 2147483648
    %v1430 = vxor.u32 %v1394, 2147483648
    %v1431 = vxor.u32 %v1397, 2147483648
    %v1432 = vxor.u32 %v1399, 2147483648
    %v1433 = vmul.f32 %v1401, 1.442695
    %v1434 = vpow.pop %v1433
    %v1435 = vmul.f32 %v1402, 1.442695
    %v1436 = vpow.pop %v1435
    %v1437 = vmul.f32 %v1403, 1.442695
    %v1438 = vpow.pop %v1437
    %v1439 = vmul.f32 %v1404, 1.442695
    %v1440 = vpow.pop %v1439
    %v1441 = vmul.f32 %v1405, 1.442695
    %v1442 = vpow.pop %v1441
    %v1443 = vmul.f32 %v1406, 1.442695
    %v1444 = vpow.pop %v1443
    %v1445 = vmul.f32 %v1407, 1.442695
    %v1446 = vpow.pop %v1445
    %v1447 = vmul.f32 %v1408, 1.442695
    %v1448 = vpow.pop %v1447
    %v1449 = vmul.f32 %v1409, 1.442695
    %v1450 = vpow.pop %v1449
    %v1451 = vmul.f32 %v1410, 1.442695
    %v1452 = vpow.pop %v1451
    %v1453 = vmul.f32 %v1411, 1.442695
    %v1454 = vpow.pop %v1453
    %v1455 = vmul.f32 %v1412, 1.442695
    %v1456 = vpow.pop %v1455
    %v1457 = vmul.f32 %v1413, 1.442695
    %v1458 = vpow.pop %v1457
    %v1459 = vmul.f32 %v1414, 1.442695
    %v1460 = vpow.pop %v1459
    %v1461 = vmul.f32 %v1415, 1.442695
    %v1462 = vpow.pop %v1461
    %v1463 = vmul.f32 %v1416, 1.442695
    %v1464 = vpow.pop %v1463
    %v1465 = vmul.f32 %v1417, 1.442695
    %v1466 = vpow.pop %v1465
    %v1467 = vmul.f32 %v1418, 1.442695
    %v1468 = vpow.pop %v1467
    %v1469 = vmul.f32 %v1419, 1.442695
    %v1470 = vpow.pop %v1469
    %v1471 = vmul.f32 %v1420, 1.442695
    %v1472 = vpow.pop %v1471
    %v1473 = vmul.f32 %v1421, 1.442695
    %v1474 = vpow.pop %v1473
    %v1475 = vmul.f32 %v1422, 1.442695
    %v1476 = vpow.pop %v1475
    %v1477 = vmul.f32 %v1423, 1.442695
    %v1478 = vpow.pop %v1477
    %v1479 = vmul.f32 %v1424, 1.442695
    %v1480 = vpow.pop %v1479
    %v1481 = vmul.f32 %v1425, 1.442695
    %v1482 = vpow.pop %v1481
    %v1483 = vmul.f32 %v1426, 1.442695
    %v1484 = vpow.pop %v1483
    %v1485 = vmul.f32 %v1427, 1.442695
    %v1486 = vpow.pop %v1485
    %v1487 = vmul.f32 %v1428, 1.442695
    %v1488 = vpow.pop %v1487
    %v1489 = vmul.f32 %v1429, 1.442695
    %v1490 = vpow.pop %v1489
    %v1491 = vmul.f32 %v1430, 1.442695
    %v1492 = vpow.pop %v1491
    %v1493 = vmul.f32 %v1431, 1.442695
    %v1494 = vpow.pop %v1493
    %v1495 = vmul.f32 %v1432, 1.442695
    %v1496 = vpow.pop %v1495
    %v1497 = vadd.f32 %v1434, 1.0
    %v1498 = vadd.f32 %v1436, 1.0
    %v1499 = vadd.f32 %v1438, 1.0
    %v1500 = vadd.f32 %v1440, 1.0
    %v1501 = vadd.f32 %v1442, 1.0
    %v1502 = vadd.f32 %v1444, 1.0
    %v1503 = vadd.f32 %v1446, 1.0
    %v1504 = vadd.f32 %v1448, 1.0
    %v1505 = vadd.f32 %v1450, 1.0
    %v1506 = vadd.f32 %v1452, 1.0
    %v1507 = vadd.f32 %v1454, 1.0
    %v1508 = vadd.f32 %v1456, 1.0
    %v1509 = vadd.f32 %v1458, 1.0
    %v1510 = vadd.f32 %v1460, 1.0
    %v1511 = vadd.f32 %v1462, 1.0
    %v1512 = vadd.f32 %v1464, 1.0
    %v1513 = vadd.f32 %v1466, 1.0
    %v1514 = vadd.f32 %v1468, 1.0
    %v1515 = vadd.f32 %v1470, 1.0
    %v1516 = vadd.f32 %v1472, 1.0
    %v1517 = vadd.f32 %v1474, 1.0
    %v1518 = vadd.f32 %v1476, 1.0
    %v1519 = vadd.f32 %v1478, 1.0
    %v1520 = vadd.f32 %v1480, 1.0
    %v1521 = vadd.f32 %v1482, 1.0
    %v1522 = vadd.f32 %v1484, 1.0
    %v1523 = vadd.f32 %v1486, 1.0
    %v1524 = vadd.f32 %v1488, 1.0
    %v1525 = vadd.f32 %v1490, 1.0
    %v1526 = vadd.f32 %v1492, 1.0
    %v1527 = vadd.f32 %v1494, 1.0
    %v1528 = vadd.f32 %v1496, 1.0
    %v1529 = vrcp.pop %v1497
    %v1530 = vmul.f32 %v1497, %v1529
    %v1531 = vsub.f32 1.0, %v1530
    %v1532 = vmul.f32 %v1529, %v1531
    %v1533 = vadd.f32 %v1529, %v1532
    %vm1534 = vweird.f32 %v1497
    %vm1535 = vweird.f32 %v1529
    %vm1536 = vmor %vm1534, %vm1535
    %v1537 = vsel %vm1536, %v1529, %v1533
    %v1538 = vand.u32 2147483647, %v1497
    %vm1539 = vcmp.eq.f32.partialorder %v1538, 8.507059e+37
    %v1540 = vand.u32 %v1497, 2147483648
    %v1541 = vor.u32 1.1754944e-38, %v1540
    %v1542 = vsel %vm1539, %v1541, %v1537
    %v1543 = vmul.f32 1.0, %v1542
    %v1544 = vrcp.pop %v1498
    %v1545 = vmul.f32 %v1498, %v1544
    %v1546 = vsub.f32 1.0, %v1545
    %v1547 = vmul.f32 %v1544, %v1546
    %v1548 = vadd.f32 %v1544, %v1547
    %vm1549 = vweird.f32 %v1498
    %vm1550 = vweird.f32 %v1544
    %vm1551 = vmor %vm1549, %vm1550
    %v1552 = vsel %vm1551, %v1544, %v1548
    %v1553 = vand.u32 2147483647, %v1498
    %vm1554 = vcmp.eq.f32.partialorder %v1553, 8.507059e+37
    %v1555 = vand.u32 %v1498, 2147483648
    %v1556 = vor.u32 1.1754944e-38, %v1555
    %v1557 = vsel %vm1554, %v1556, %v1552
    %v1558 = vmul.f32 1.0, %v1557
    %v1559 = vrcp.pop %v1499
    %v1560 = vmul.f32 %v1499, %v1559
    %v1561 = vsub.f32 1.0, %v1560
    %v1562 = vmul.f32 %v1559, %v1561
    %v1563 = vadd.f32 %v1559, %v1562
    %vm1564 = vweird.f32 %v1499
    %vm1565 = vweird.f32 %v1559
    %vm1566 = vmor %vm1564, %vm1565
    %v1567 = vsel %vm1566, %v1559, %v1563
    %v1568 = vand.u32 2147483647, %v1499
    %vm1569 = vcmp.eq.f32.partialorder %v1568, 8.507059e+37
    %v1570 = vand.u32 %v1499, 2147483648
    %v1571 = vor.u32 1.1754944e-38, %v1570
    %v1572 = vsel %vm1569, %v1571, %v1567
    %v1573 = vmul.f32 1.0, %v1572
    %v1574 = vrcp.pop %v1500
    %v1575 = vmul.f32 %v1500, %v1574
    %v1576 = vsub.f32 1.0, %v1575
    %v1577 = vmul.f32 %v1574, %v1576
    %v1578 = vadd.f32 %v1574, %v1577
    %vm1579 = vweird.f32 %v1500
    %vm1580 = vweird.f32 %v1574
    %vm1581 = vmor %vm1579, %vm1580
    %v1582 = vsel %vm1581, %v1574, %v1578
    %v1583 = vand.u32 2147483647, %v1500
    %vm1584 = vcmp.eq.f32.partialorder %v1583, 8.507059e+37
    %v1585 = vand.u32 %v1500, 2147483648
    %v1586 = vor.u32 1.1754944e-38, %v1585
    %v1587 = vsel %vm1584, %v1586, %v1582
    %v1588 = vmul.f32 1.0, %v1587
    %v1589 = vrcp.pop %v1501
    %v1590 = vmul.f32 %v1501, %v1589
    %v1591 = vsub.f32 1.0, %v1590
    %v1592 = vmul.f32 %v1589, %v1591
    %v1593 = vadd.f32 %v1589, %v1592
    %vm1594 = vweird.f32 %v1501
    %vm1595 = vweird.f32 %v1589
    %vm1596 = vmor %vm1594, %vm1595
    %v1597 = vsel %vm1596, %v1589, %v1593
    %v1598 = vand.u32 2147483647, %v1501
    %vm1599 = vcmp.eq.f32.partialorder %v1598, 8.507059e+37
    %v1600 = vand.u32 %v1501, 2147483648
    %v1601 = vor.u32 1.1754944e-38, %v1600
    %v1602 = vsel %vm1599, %v1601, %v1597
    %v1603 = vmul.f32 1.0, %v1602
    %v1604 = vrcp.pop %v1502
    %v1605 = vmul.f32 %v1502, %v1604
    %v1606 = vsub.f32 1.0, %v1605
    %v1607 = vmul.f32 %v1604, %v1606
    %v1608 = vadd.f32 %v1604, %v1607
    %vm1609 = vweird.f32 %v1502
    %vm1610 = vweird.f32 %v1604
    %vm1611 = vmor %vm1609, %vm1610
    %v1612 = vsel %vm1611, %v1604, %v1608
    %v1613 = vand.u32 2147483647, %v1502
    %vm1614 = vcmp.eq.f32.partialorder %v1613, 8.507059e+37
    %v1615 = vand.u32 %v1502, 2147483648
    %v1616 = vor.u32 1.1754944e-38, %v1615
    %v1617 = vsel %vm1614, %v1616, %v1612
    %v1618 = vmul.f32 1.0, %v1617
    %v1619 = vrcp.pop %v1503
    %v1620 = vmul.f32 %v1503, %v1619
    %v1621 = vsub.f32 1.0, %v1620
    %v1622 = vmul.f32 %v1619, %v1621
    %v1623 = vadd.f32 %v1619, %v1622
    %vm1624 = vweird.f32 %v1503
    %vm1625 = vweird.f32 %v1619
    %vm1626 = vmor %vm1624, %vm1625
    %v1627 = vsel %vm1626, %v1619, %v1623
    %v1628 = vand.u32 2147483647, %v1503
    %vm1629 = vcmp.eq.f32.partialorder %v1628, 8.507059e+37
    %v1630 = vand.u32 %v1503, 2147483648
    %v1631 = vor.u32 1.1754944e-38, %v1630
    %v1632 = vsel %vm1629, %v1631, %v1627
    %v1633 = vmul.f32 1.0, %v1632
    %v1634 = vrcp.pop %v1504
    %v1635 = vmul.f32 %v1504, %v1634
    %v1636 = vsub.f32 1.0, %v1635
    %v1637 = vmul.f32 %v1634, %v1636
    %v1638 = vadd.f32 %v1634, %v1637
    %vm1639 = vweird.f32 %v1504
    %vm1640 = vweird.f32 %v1634
    %vm1641 = vmor %vm1639, %vm1640
    %v1642 = vsel %vm1641, %v1634, %v1638
    %v1643 = vand.u32 2147483647, %v1504
    %vm1644 = vcmp.eq.f32.partialorder %v1643, 8.507059e+37
    %v1645 = vand.u32 %v1504, 2147483648
    %v1646 = vor.u32 1.1754944e-38, %v1645
    %v1647 = vsel %vm1644, %v1646, %v1642
    %v1648 = vmul.f32 1.0, %v1647
    %v1649 = vrcp.pop %v1505
    %v1650 = vmul.f32 %v1505, %v1649
    %v1651 = vsub.f32 1.0, %v1650
    %v1652 = vmul.f32 %v1649, %v1651
    %v1653 = vadd.f32 %v1649, %v1652
    %vm1654 = vweird.f32 %v1505
    %vm1655 = vweird.f32 %v1649
    %vm1656 = vmor %vm1654, %vm1655
    %v1657 = vsel %vm1656, %v1649, %v1653
    %v1658 = vand.u32 2147483647, %v1505
    %vm1659 = vcmp.eq.f32.partialorder %v1658, 8.507059e+37
    %v1660 = vand.u32 %v1505, 2147483648
    %v1661 = vor.u32 1.1754944e-38, %v1660
    %v1662 = vsel %vm1659, %v1661, %v1657
    %v1663 = vmul.f32 1.0, %v1662
    %v1664 = vrcp.pop %v1506
    %v1665 = vmul.f32 %v1506, %v1664
    %v1666 = vsub.f32 1.0, %v1665
    %v1667 = vmul.f32 %v1664, %v1666
    %v1668 = vadd.f32 %v1664, %v1667
    %vm1669 = vweird.f32 %v1506
    %vm1670 = vweird.f32 %v1664
    %vm1671 = vmor %vm1669, %vm1670
    %v1672 = vsel %vm1671, %v1664, %v1668
    %v1673 = vand.u32 2147483647, %v1506
    %vm1674 = vcmp.eq.f32.partialorder %v1673, 8.507059e+37
    %v1675 = vand.u32 %v1506, 2147483648
    %v1676 = vor.u32 1.1754944e-38, %v1675
    %v1677 = vsel %vm1674, %v1676, %v1672
    %v1678 = vmul.f32 1.0, %v1677
    %v1679 = vrcp.pop %v1507
    %v1680 = vmul.f32 %v1507, %v1679
    %v1681 = vsub.f32 1.0, %v1680
    %v1682 = vmul.f32 %v1679, %v1681
    %v1683 = vadd.f32 %v1679, %v1682
    %vm1684 = vweird.f32 %v1507
    %vm1685 = vweird.f32 %v1679
    %vm1686 = vmor %vm1684, %vm1685
    %v1687 = vsel %vm1686, %v1679, %v1683
    %v1688 = vand.u32 2147483647, %v1507
    %vm1689 = vcmp.eq.f32.partialorder %v1688, 8.507059e+37
    %v1690 = vand.u32 %v1507, 2147483648
    %v1691 = vor.u32 1.1754944e-38, %v1690
    %v1692 = vsel %vm1689, %v1691, %v1687
    %v1693 = vmul.f32 1.0, %v1692
    %v1694 = vrcp.pop %v1508
    %v1695 = vmul.f32 %v1508, %v1694
    %v1696 = vsub.f32 1.0, %v1695
    %v1697 = vmul.f32 %v1694, %v1696
    %v1698 = vadd.f32 %v1694, %v1697
    %vm1699 = vweird.f32 %v1508
    %vm1700 = vweird.f32 %v1694
    %vm1701 = vmor %vm1699, %vm1700
    %v1702 = vsel %vm1701, %v1694, %v1698
    %v1703 = vand.u32 2147483647, %v1508
    %vm1704 = vcmp.eq.f32.partialorder %v1703, 8.507059e+37
    %v1705 = vand.u32 %v1508, 2147483648
    %v1706 = vor.u32 1.1754944e-38, %v1705
    %v1707 = vsel %vm1704, %v1706, %v1702
    %v1708 = vmul.f32 1.0, %v1707
    %v1709 = vrcp.pop %v1509
    %v1710 = vmul.f32 %v1509, %v1709
    %v1711 = vsub.f32 1.0, %v1710
    %v1712 = vmul.f32 %v1709, %v1711
    %v1713 = vadd.f32 %v1709, %v1712
    %vm1714 = vweird.f32 %v1509
    %vm1715 = vweird.f32 %v1709
    %vm1716 = vmor %vm1714, %vm1715
    %v1717 = vsel %vm1716, %v1709, %v1713
    %v1718 = vand.u32 2147483647, %v1509
    %vm1719 = vcmp.eq.f32.partialorder %v1718, 8.507059e+37
    %v1720 = vand.u32 %v1509, 2147483648
    %v1721 = vor.u32 1.1754944e-38, %v1720
    %v1722 = vsel %vm1719, %v1721, %v1717
    %v1723 = vmul.f32 1.0, %v1722
    %v1724 = vrcp.pop %v1510
    %v1725 = vmul.f32 %v1510, %v1724
    %v1726 = vsub.f32 1.0, %v1725
    %v1727 = vmul.f32 %v1724, %v1726
    %v1728 = vadd.f32 %v1724, %v1727
    %vm1729 = vweird.f32 %v1510
    %vm1730 = vweird.f32 %v1724
    %vm1731 = vmor %vm1729, %vm1730
    %v1732 = vsel %vm1731, %v1724, %v1728
    %v1733 = vand.u32 2147483647, %v1510
    %vm1734 = vcmp.eq.f32.partialorder %v1733, 8.507059e+37
    %v1735 = vand.u32 %v1510, 2147483648
    %v1736 = vor.u32 1.1754944e-38, %v1735
    %v1737 = vsel %vm1734, %v1736, %v1732
    %v1738 = vmul.f32 1.0, %v1737
    %v1739 = vrcp.pop %v1511
    %v1740 = vmul.f32 %v1511, %v1739
    %v1741 = vsub.f32 1.0, %v1740
    %v1742 = vmul.f32 %v1739, %v1741
    %v1743 = vadd.f32 %v1739, %v1742
    %vm1744 = vweird.f32 %v1511
    %vm1745 = vweird.f32 %v1739
    %vm1746 = vmor %vm1744, %vm1745
    %v1747 = vsel %vm1746, %v1739, %v1743
    %v1748 = vand.u32 2147483647, %v1511
    %vm1749 = vcmp.eq.f32.partialorder %v1748, 8.507059e+37
    %v1750 = vand.u32 %v1511, 2147483648
    %v1751 = vor.u32 1.1754944e-38, %v1750
    %v1752 = vsel %vm1749, %v1751, %v1747
    %v1753 = vmul.f32 1.0, %v1752
    %v1754 = vrcp.pop %v1512
    %v1755 = vmul.f32 %v1512, %v1754
    %v1756 = vsub.f32 1.0, %v1755
    %v1757 = vmul.f32 %v1754, %v1756
    %v1758 = vadd.f32 %v1754, %v1757
    %vm1759 = vweird.f32 %v1512
    %vm1760 = vweird.f32 %v1754
    %vm1761 = vmor %vm1759, %vm1760
    %v1762 = vsel %vm1761, %v1754, %v1758
    %v1763 = vand.u32 2147483647, %v1512
    %vm1764 = vcmp.eq.f32.partialorder %v1763, 8.507059e+37
    %v1765 = vand.u32 %v1512, 2147483648
    %v1766 = vor.u32 1.1754944e-38, %v1765
    %v1767 = vsel %vm1764, %v1766, %v1762
    %v1768 = vmul.f32 1.0, %v1767
    %v1769 = vrcp.pop %v1513
    %v1770 = vmul.f32 %v1513, %v1769
    %v1771 = vsub.f32 1.0, %v1770
    %v1772 = vmul.f32 %v1769, %v1771
    %v1773 = vadd.f32 %v1769, %v1772
    %vm1774 = vweird.f32 %v1513
    %vm1775 = vweird.f32 %v1769
    %vm1776 = vmor %vm1774, %vm1775
    %v1777 = vsel %vm1776, %v1769, %v1773
    %v1778 = vand.u32 2147483647, %v1513
    %vm1779 = vcmp.eq.f32.partialorder %v1778, 8.507059e+37
    %v1780 = vand.u32 %v1513, 2147483648
    %v1781 = vor.u32 1.1754944e-38, %v1780
    %v1782 = vsel %vm1779, %v1781, %v1777
    %v1783 = vmul.f32 1.0, %v1782
    %v1784 = vrcp.pop %v1514
    %v1785 = vmul.f32 %v1514, %v1784
    %v1786 = vsub.f32 1.0, %v1785
    %v1787 = vmul.f32 %v1784, %v1786
    %v1788 = vadd.f32 %v1784, %v1787
    %vm1789 = vweird.f32 %v1514
    %vm1790 = vweird.f32 %v1784
    %vm1791 = vmor %vm1789, %vm1790
    %v1792 = vsel %vm1791, %v1784, %v1788
    %v1793 = vand.u32 2147483647, %v1514
    %vm1794 = vcmp.eq.f32.partialorder %v1793, 8.507059e+37
    %v1795 = vand.u32 %v1514, 2147483648
    %v1796 = vor.u32 1.1754944e-38, %v1795
    %v1797 = vsel %vm1794, %v1796, %v1792
    %v1798 = vmul.f32 1.0, %v1797
    %v1799 = vrcp.pop %v1515
    %v1800 = vmul.f32 %v1515, %v1799
    %v1801 = vsub.f32 1.0, %v1800
    %v1802 = vmul.f32 %v1799, %v1801
    %v1803 = vadd.f32 %v1799, %v1802
    %vm1804 = vweird.f32 %v1515
    %vm1805 = vweird.f32 %v1799
    %vm1806 = vmor %vm1804, %vm1805
    %v1807 = vsel %vm1806, %v1799, %v1803
    %v1808 = vand.u32 2147483647, %v1515
    %vm1809 = vcmp.eq.f32.partialorder %v1808, 8.507059e+37
    %v1810 = vand.u32 %v1515, 2147483648
    %v1811 = vor.u32 1.1754944e-38, %v1810
    %v1812 = vsel %vm1809, %v1811, %v1807
    %v1813 = vmul.f32 1.0, %v1812
    %v1814 = vrcp.pop %v1516
    %v1815 = vmul.f32 %v1516, %v1814
    %v1816 = vsub.f32 1.0, %v1815
    %v1817 = vmul.f32 %v1814, %v1816
    %v1818 = vadd.f32 %v1814, %v1817
    %vm1819 = vweird.f32 %v1516
    %vm1820 = vweird.f32 %v1814
    %vm1821 = vmor %vm1819, %vm1820
    %v1822 = vsel %vm1821, %v1814, %v1818
    %v1823 = vand.u32 2147483647, %v1516
    %vm1824 = vcmp.eq.f32.partialorder %v1823, 8.507059e+37
    %v1825 = vand.u32 %v1516, 2147483648
    %v1826 = vor.u32 1.1754944e-38, %v1825
    %v1827 = vsel %vm1824, %v1826, %v1822
    %v1828 = vmul.f32 1.0, %v1827
    %v1829 = vrcp.pop %v1517
    %v1830 = vmul.f32 %v1517, %v1829
    %v1831 = vsub.f32 1.0, %v1830
    %v1832 = vmul.f32 %v1829, %v1831
    %v1833 = vadd.f32 %v1829, %v1832
    %vm1834 = vweird.f32 %v1517
    %vm1835 = vweird.f32 %v1829
    %vm1836 = vmor %vm1834, %vm1835
    %v1837 = vsel %vm1836, %v1829, %v1833
    %v1838 = vand.u32 2147483647, %v1517
    %vm1839 = vcmp.eq.f32.partialorder %v1838, 8.507059e+37
    %v1840 = vand.u32 %v1517, 2147483648
    %v1841 = vor.u32 1.1754944e-38, %v1840
    %v1842 = vsel %vm1839, %v1841, %v1837
    %v1843 = vmul.f32 1.0, %v1842
    %v1844 = vrcp.pop %v1518
    %v1845 = vmul.f32 %v1518, %v1844
    %v1846 = vsub.f32 1.0, %v1845
    %v1847 = vmul.f32 %v1844, %v1846
    %v1848 = vadd.f32 %v1844, %v1847
    %vm1849 = vweird.f32 %v1518
    %vm1850 = vweird.f32 %v1844
    %vm1851 = vmor %vm1849, %vm1850
    %v1852 = vsel %vm1851, %v1844, %v1848
    %v1853 = vand.u32 2147483647, %v1518
    %vm1854 = vcmp.eq.f32.partialorder %v1853, 8.507059e+37
    %v1855 = vand.u32 %v1518, 2147483648
    %v1856 = vor.u32 1.1754944e-38, %v1855
    %v1857 = vsel %vm1854, %v1856, %v1852
    %v1858 = vmul.f32 1.0, %v1857
    %v1859 = vrcp.pop %v1519
    %v1860 = vmul.f32 %v1519, %v1859
    %v1861 = vsub.f32 1.0, %v1860
    %v1862 = vmul.f32 %v1859, %v1861
    %v1863 = vadd.f32 %v1859, %v1862
    %vm1864 = vweird.f32 %v1519
    %vm1865 = vweird.f32 %v1859
    %vm1866 = vmor %vm1864, %vm1865
    %v1867 = vsel %vm1866, %v1859, %v1863
    %v1868 = vand.u32 2147483647, %v1519
    %vm1869 = vcmp.eq.f32.partialorder %v1868, 8.507059e+37
    %v1870 = vand.u32 %v1519, 2147483648
    %v1871 = vor.u32 1.1754944e-38, %v1870
    %v1872 = vsel %vm1869, %v1871, %v1867
    %v1873 = vmul.f32 1.0, %v1872
    %v1874 = vrcp.pop %v1520
    %v1875 = vmul.f32 %v1520, %v1874
    %v1876 = vsub.f32 1.0, %v1875
    %v1877 = vmul.f32 %v1874, %v1876
    %v1878 = vadd.f32 %v1874, %v1877
    %vm1879 = vweird.f32 %v1520
    %vm1880 = vweird.f32 %v1874
    %vm1881 = vmor %vm1879, %vm1880
    %v1882 = vsel %vm1881, %v1874, %v1878
    %v1883 = vand.u32 2147483647, %v1520
    %vm1884 = vcmp.eq.f32.partialorder %v1883, 8.507059e+37
    %v1885 = vand.u32 %v1520, 2147483648
    %v1886 = vor.u32 1.1754944e-38, %v1885
    %v1887 = vsel %vm1884, %v1886, %v1882
    %v1888 = vmul.f32 1.0, %v1887
    %v1889 = vrcp.pop %v1521
    %v1890 = vmul.f32 %v1521, %v1889
    %v1891 = vsub.f32 1.0, %v1890
    %v1892 = vmul.f32 %v1889, %v1891
    %v1893 = vadd.f32 %v1889, %v1892
    %vm1894 = vweird.f32 %v1521
    %vm1895 = vweird.f32 %v1889
    %vm1896 = vmor %vm1894, %vm1895
    %v1897 = vsel %vm1896, %v1889, %v1893
    %v1898 = vand.u32 2147483647, %v1521
    %vm1899 = vcmp.eq.f32.partialorder %v1898, 8.507059e+37
    %v1900 = vand.u32 %v1521, 2147483648
    %v1901 = vor.u32 1.1754944e-38, %v1900
    %v1902 = vsel %vm1899, %v1901, %v1897
    %v1903 = vmul.f32 1.0, %v1902
    %v1904 = vrcp.pop %v1522
    %v1905 = vmul.f32 %v1522, %v1904
    %v1906 = vsub.f32 1.0, %v1905
    %v1907 = vmul.f32 %v1904, %v1906
    %v1908 = vadd.f32 %v1904, %v1907
    %vm1909 = vweird.f32 %v1522
    %vm1910 = vweird.f32 %v1904
    %vm1911 = vmor %vm1909, %vm1910
    %v1912 = vsel %vm1911, %v1904, %v1908
    %v1913 = vand.u32 2147483647, %v1522
    %vm1914 = vcmp.eq.f32.partialorder %v1913, 8.507059e+37
    %v1915 = vand.u32 %v1522, 2147483648
    %v1916 = vor.u32 1.1754944e-38, %v1915
    %v1917 = vsel %vm1914, %v1916, %v1912
    %v1918 = vmul.f32 1.0, %v1917
    %v1919 = vrcp.pop %v1523
    %v1920 = vmul.f32 %v1523, %v1919
    %v1921 = vsub.f32 1.0, %v1920
    %v1922 = vmul.f32 %v1919, %v1921
    %v1923 = vadd.f32 %v1919, %v1922
    %vm1924 = vweird.f32 %v1523
    %vm1925 = vweird.f32 %v1919
    %vm1926 = vmor %vm1924, %vm1925
    %v1927 = vsel %vm1926, %v1919, %v1923
    %v1928 = vand.u32 2147483647, %v1523
    %vm1929 = vcmp.eq.f32.partialorder %v1928, 8.507059e+37
    %v1930 = vand.u32 %v1523, 2147483648
    %v1931 = vor.u32 1.1754944e-38, %v1930
    %v1932 = vsel %vm1929, %v1931, %v1927
    %v1933 = vmul.f32 1.0, %v1932
    %v1934 = vrcp.pop %v1524
    %v1935 = vmul.f32 %v1524, %v1934
    %v1936 = vsub.f32 1.0, %v1935
    %v1937 = vmul.f32 %v1934, %v1936
    %v1938 = vadd.f32 %v1934, %v1937
    %vm1939 = vweird.f32 %v1524
    %vm1940 = vweird.f32 %v1934
    %vm1941 = vmor %vm1939, %vm1940
    %v1942 = vsel %vm1941, %v1934, %v1938
    %v1943 = vand.u32 2147483647, %v1524
    %vm1944 = vcmp.eq.f32.partialorder %v1943, 8.507059e+37
    %v1945 = vand.u32 %v1524, 2147483648
    %v1946 = vor.u32 1.1754944e-38, %v1945
    %v1947 = vsel %vm1944, %v1946, %v1942
    %v1948 = vmul.f32 1.0, %v1947
    %v1949 = vrcp.pop %v1525
    %v1950 = vmul.f32 %v1525, %v1949
    %v1951 = vsub.f32 1.0, %v1950
    %v1952 = vmul.f32 %v1949, %v1951
    %v1953 = vadd.f32 %v1949, %v1952
    %vm1954 = vweird.f32 %v1525
    %vm1955 = vweird.f32 %v1949
    %vm1956 = vmor %vm1954, %vm1955
    %v1957 = vsel %vm1956, %v1949, %v1953
    %v1958 = vand.u32 2147483647, %v1525
    %vm1959 = vcmp.eq.f32.partialorder %v1958, 8.507059e+37
    %v1960 = vand.u32 %v1525, 2147483648
    %v1961 = vor.u32 1.1754944e-38, %v1960
    %v1962 = vsel %vm1959, %v1961, %v1957
    %v1963 = vmul.f32 1.0, %v1962
    %v1964 = vrcp.pop %v1526
    %v1965 = vmul.f32 %v1526, %v1964
    %v1966 = vsub.f32 1.0, %v1965
    %v1967 = vmul.f32 %v1964, %v1966
    %v1968 = vadd.f32 %v1964, %v1967
    %vm1969 = vweird.f32 %v1526
    %vm1970 = vweird.f32 %v1964
    %vm1971 = vmor %vm1969, %vm1970
    %v1972 = vsel %vm1971, %v1964, %v1968
    %v1973 = vand.u32 2147483647, %v1526
    %vm1974 = vcmp.eq.f32.partialorder %v1973, 8.507059e+37
    %v1975 = vand.u32 %v1526, 2147483648
    %v1976 = vor.u32 1.1754944e-38, %v1975
    %v1977 = vsel %vm1974, %v1976, %v1972
    %v1978 = vmul.f32 1.0, %v1977
    %v1979 = vrcp.pop %v1527
    %v1980 = vmul.f32 %v1527, %v1979
    %v1981 = vsub.f32 1.0, %v1980
    %v1982 = vmul.f32 %v1979, %v1981
    %v1983 = vadd.f32 %v1979, %v1982
    %vm1984 = vweird.f32 %v1527
    %vm1985 = vweird.f32 %v1979
    %vm1986 = vmor %vm1984, %vm1985
    %v1987 = vsel %vm1986, %v1979, %v1983
    %v1988 = vand.u32 2147483647, %v1527
    %vm1989 = vcmp.eq.f32.partialorder %v1988, 8.507059e+37
    %v1990 = vand.u32 %v1527, 2147483648
    %v1991 = vor.u32 1.1754944e-38, %v1990
    %v1992 = vsel %vm1989, %v1991, %v1987
    %v1993 = vmul.f32 1.0, %v1992
    %v1994 = vrcp.pop %v1528
    %v1995 = vmul.f32 %v1528, %v1994
    %v1996 = vsub.f32 1.0, %v1995
    %v1997 = vmul.f32 %v1994, %v1996
    %v1998 = vadd.f32 %v1994, %v1997
    %vm1999 = vweird.f32 %v1528
    %vm2000 = vweird.f32 %v1994
    %vm2001 = vmor %vm1999, %vm2000
    %v2002 = vsel %vm2001, %v1994, %v1998
    %v2003 = vand.u32 2147483647, %v1528
    %vm2004 = vcmp.eq.f32.partialorder %v2003, 8.507059e+37
    %v2005 = vand.u32 %v1528, 2147483648
    %v2006 = vor.u32 1.1754944e-38, %v2005
    %v2007 = vsel %vm2004, %v2006, %v2002
    %v2008 = vmul.f32 1.0, %v2007
    %v2009 = vmul.f32 %v1543, %v191
    %v2010 = vmul.f32 %v1558, %v192
    %v2011 = vmul.f32 %v1573, %v193
    %v2012 = vmul.f32 %v1588, %v194
    %v2013 = vmul.f32 %v1603, %v195
    %v2014 = vmul.f32 %v1618, %v196
    %v2015 = vmul.f32 %v1633, %v197
    %v2016 = vmul.f32 %v1648, %v198
    %v2017 = vmul.f32 %v1663, %v199
    %v2018 = vmul.f32 %v1678, %v200
    %v2019 = vmul.f32 %v1693, %v201
    %v2020 = vmul.f32 %v1708, %v202
    %v2021 = vmul.f32 %v1723, %v203
    %v2022 = vmul.f32 %v1738, %v204
    %v2023 = vmul.f32 %v1753, %v205
    %v2024 = vmul.f32 %v1768, %v206
    %v2025 = vmul.f32 %v1783, %v207
    %v2026 = vmul.f32 %v1798, %v208
    %v2027 = vmul.f32 %v1813, %v209
    %v2028 = vmul.f32 %v1828, %v210
    %v2029 = vmul.f32 %v1843, %v211
    %v2030 = vmul.f32 %v1858, %v212
    %v2031 = vmul.f32 %v1873, %v213
    %v2032 = vmul.f32 %v1888, %v214
    %v2033 = vmul.f32 %v1903, %v215
    %v2034 = vmul.f32 %v1918, %v216
    %v2035 = vmul.f32 %v1933, %v217
    %v2036 = vmul.f32 %v1948, %v218
    %v2037 = vmul.f32 %v1963, %v219
    %v2038 = vmul.f32 %v1978, %v220
    %v2039 = vmul.f32 %v1993, %v221
    %v2040 = vmul.f32 %v2008, %v222
    %v2041 = vpack.c.bf16 %v2010, %v2009
    %v2042 = vpack.c.bf16 %v2012, %v2011
    %v2043 = vpack.c.bf16 %v2014, %v2013
    %v2044 = vpack.c.bf16 %v2016, %v2015
    %v2045 = vpack.c.bf16 %v2018, %v2017
    %v2046 = vpack.c.bf16 %v2020, %v2019
    %v2047 = vpack.c.bf16 %v2022, %v2021
    %v2048 = vpack.c.bf16 %v2024, %v2023
    %v2049 = vpack.c.bf16 %v2026, %v2025
    %v2050 = vpack.c.bf16 %v2028, %v2027
    %v2051 = vpack.c.bf16 %v2030, %v2029
    %v2052 = vpack.c.bf16 %v2032, %v2031
    %v2053 = vpack.c.bf16 %v2034, %v2033
    %v2054 = vpack.c.bf16 %v2036, %v2035
    %v2055 = vpack.c.bf16 %v2038, %v2037
    %v2056 = vpack.c.bf16 %v2040, %v2039
    %v2057 = vld [vmem:[#allocation10] sm:$0xf]
    %v2058 = vld [vmem:[#allocation10 + $0x4] sm:$0xf]
    %v2059 = vld [vmem:[#allocation10 + $0x8] sm:$0xf]
    %v2060 = vld [vmem:[#allocation10 + $0xc] sm:$0xf]
    %v2061 = vld [vmem:[#allocation10 + $0x10] sm:$0xf]
    %v2062 = vld [vmem:[#allocation10 + $0x14] sm:$0xf]
    %v2063 = vld [vmem:[#allocation10 + $0x18] sm:$0xf]
    %v2064 = vld [vmem:[#allocation10 + $0x1c] sm:$0xf]
    %v2065 = vld [vmem:[#allocation10 + $0x20] sm:$0xf]
    %v2066 = vld [vmem:[#allocation10 + $0x24] sm:$0xf]
    %v2067 = vld [vmem:[#allocation10 + $0x28] sm:$0xf]
    %v2068 = vld [vmem:[#allocation10 + $0x2c] sm:$0xf]
    %v2069 = vld [vmem:[#allocation10 + $0x30] sm:$0xf]
    %v2070 = vld [vmem:[#allocation10 + $0x34] sm:$0xf]
    %v2071 = vld [vmem:[#allocation10 + $0x38] sm:$0xf]
    %v2072 = vld [vmem:[#allocation10 + $0x3c] sm:$0xf]
    %v2073 = vpack.c.bf16 %v1117, %v1116
    %v2074 = vpack.c.bf16 %v1119, %v1118
    %v2075 = vpack.c.bf16 %v1121, %v1120
    %v2076 = vpack.c.bf16 %v1123, %v1122
    %v2077 = vpack.c.bf16 %v1125, %v1124
    %v2078 = vpack.c.bf16 %v1127, %v1126
    %v2079 = vpack.c.bf16 %v1129, %v1128
    %v2080 = vpack.c.bf16 %v1131, %v1130
    %v2081 = vpack.c.bf16 %v1133, %v1132
    %v2082 = vpack.c.bf16 %v1135, %v1134
    %v2083 = vpack.c.bf16 %v1137, %v1136
    %v2084 = vpack.c.bf16 %v1139, %v1138
    %v2085 = vpack.c.bf16 %v1141, %v1140
    %v2086 = vpack.c.bf16 %v1143, %v1142
    %v2087 = vpack.c.bf16 %v1145, %v1144
    %v2088 = vpack.c.bf16 %v1147, %v1146
    %v2089 = vld [vmem:[#allocation11] sm:$0xf]
    %v2090 = vld [vmem:[#allocation11 + $0x4] sm:$0xf]
    %v2091 = vld [vmem:[#allocation11 + $0x8] sm:$0xf]
    %v2092 = vld [vmem:[#allocation11 + $0xc] sm:$0xf]
    %v2093 = vld [vmem:[#allocation11 + $0x10] sm:$0xf]
    %v2094 = vld [vmem:[#allocation11 + $0x14] sm:$0xf]
    %v2095 = vld [vmem:[#allocation11 + $0x18] sm:$0xf]
    %v2096 = vld [vmem:[#allocation11 + $0x1c] sm:$0xf]
    %v2097 = vld [vmem:[#allocation11 + $0x20] sm:$0xf]
    %v2098 = vld [vmem:[#allocation11 + $0x24] sm:$0xf]
    %v2099 = vld [vmem:[#allocation11 + $0x28] sm:$0xf]
    %v2100 = vld [vmem:[#allocation11 + $0x2c] sm:$0xf]
    %v2101 = vld [vmem:[#allocation11 + $0x30] sm:$0xf]
    %v2102 = vld [vmem:[#allocation11 + $0x34] sm:$0xf]
    %v2103 = vld [vmem:[#allocation11 + $0x38] sm:$0xf]
    %v2104 = vld [vmem:[#allocation11 + $0x3c] sm:$0xf]
    %v2121 = vunpack.c.l.b16 %v2089
    %v2122 = vunpack.c.l.b16 %v2090
    %v2123 = vunpack.c.l.b16 %v2091
    %v2124 = vunpack.c.l.b16 %v2092
    %v2125 = vunpack.c.l.b16 %v2093
    %v2126 = vunpack.c.l.b16 %v2094
    %v2127 = vunpack.c.l.b16 %v2095
    %v2128 = vunpack.c.l.b16 %v2096
    %v2129 = vunpack.c.l.b16 %v2097
    %v2130 = vunpack.c.l.b16 %v2098
    %v2131 = vunpack.c.l.b16 %v2099
    %v2132 = vunpack.c.l.b16 %v2100
    %v2133 = vunpack.c.l.b16 %v2101
    %v2134 = vunpack.c.l.b16 %v2102
    %v2135 = vunpack.c.l.b16 %v2103
    %v2136 = vunpack.c.l.b16 %v2104
    %v2137 = vpack.c.b16 %v2122, %v2121
    %v2138 = vpack.c.b16 %v2124, %v2123
    %v2139 = vpack.c.b16 %v2126, %v2125
    %v2140 = vpack.c.b16 %v2128, %v2127
    %v2141 = vpack.c.b16 %v2130, %v2129
    %v2142 = vpack.c.b16 %v2132, %v2131
    %v2143 = vpack.c.b16 %v2134, %v2133
    %v2144 = vpack.c.b16 %v2136, %v2135
    %2153 = vmatpush.bf16.msra.mxu0 %v2144
    %2154 = vmatpush.bf16.msra.mxu0 %v2143
    %2155 = vmatpush.bf16.msra.mxu0 %v2142
    %2156 = vmatpush.bf16.msra.mxu0 %v2141
    %2157 = vmatpush.bf16.msra.mxu0 %v2140
    %2158 = vmatpush.bf16.msra.mxu0 %v2139
    %2159 = vmatpush.bf16.msra.mxu0 %v2138
    %2160 = vmatpush.bf16.msra.mxu0 %v2137
    %2161 = vmatmul.bf16.gmra.mxu0 %v2073
    %v2162 = vpop.f32.mrf.mxu0
    %v2163 = vadd.f32 0.0, %v2162
    %v2164 = vpop.f32.mrf.mxu0
    %v2165 = vadd.f32 0.0, %v2164
    %2166 = vmatmul.bf16.gmra.mxu0 %v2074
    %v2167 = vpop.f32.mrf.mxu0
    %v2168 = vadd.f32 0.0, %v2167
    %v2169 = vpop.f32.mrf.mxu0
    %v2170 = vadd.f32 0.0, %v2169
    %2171 = vmatmul.bf16.gmra.mxu0 %v2075
    %v2172 = vpop.f32.mrf.mxu0
    %v2173 = vadd.f32 0.0, %v2172
    %v2174 = vpop.f32.mrf.mxu0
    %v2175 = vadd.f32 0.0, %v2174
    %2176 = vmatmul.bf16.gmra.mxu0 %v2076
    %v2177 = vpop.f32.mrf.mxu0
    %v2178 = vadd.f32 0.0, %v2177
    %v2179 = vpop.f32.mrf.mxu0
    %v2180 = vadd.f32 0.0, %v2179
    %2181 = vmatmul.bf16.gmra.mxu0 %v2077
    %v2182 = vpop.f32.mrf.mxu0
    %v2183 = vadd.f32 0.0, %v2182
    %v2184 = vpop.f32.mrf.mxu0
    %v2185 = vadd.f32 0.0, %v2184
    %2186 = vmatmul.bf16.gmra.mxu0 %v2078
    %v2187 = vpop.f32.mrf.mxu0
    %v2188 = vadd.f32 0.0, %v2187
    %v2189 = vpop.f32.mrf.mxu0
    %v2190 = vadd.f32 0.0, %v2189
    %2191 = vmatmul.bf16.gmra.mxu0 %v2079
    %v2192 = vpop.f32.mrf.mxu0
    %v2193 = vadd.f32 0.0, %v2192
    %v2194 = vpop.f32.mrf.mxu0
    %v2195 = vadd.f32 0.0, %v2194
    %2196 = vmatmul.bf16.gmra.mxu0 %v2080
    %v2197 = vpop.f32.mrf.mxu0
    %v2198 = vadd.f32 0.0, %v2197
    %v2199 = vpop.f32.mrf.mxu0
    %v2200 = vadd.f32 0.0, %v2199
    %2201 = vmatmul.bf16.gmra.mxu0 %v2081
    %v2202 = vpop.f32.mrf.mxu0
    %v2203 = vadd.f32 0.0, %v2202
    %v2204 = vpop.f32.mrf.mxu0
    %v2205 = vadd.f32 0.0, %v2204
    %2206 = vmatmul.bf16.gmra.mxu0 %v2082
    %v2207 = vpop.f32.mrf.mxu0
    %v2208 = vadd.f32 0.0, %v2207
    %v2209 = vpop.f32.mrf.mxu0
    %v2210 = vadd.f32 0.0, %v2209
    %2211 = vmatmul.bf16.gmra.mxu0 %v2083
    %v2212 = vpop.f32.mrf.mxu0
    %v2213 = vadd.f32 0.0, %v2212
    %v2214 = vpop.f32.mrf.mxu0
    %v2215 = vadd.f32 0.0, %v2214
    %2216 = vmatmul.bf16.gmra.mxu0 %v2084
    %v2217 = vpop.f32.mrf.mxu0
    %v2218 = vadd.f32 0.0, %v2217
    %v2219 = vpop.f32.mrf.mxu0
    %v2220 = vadd.f32 0.0, %v2219
    %2221 = vmatmul.bf16.gmra.mxu0 %v2085
    %v2222 = vpop.f32.mrf.mxu0
    %v2223 = vadd.f32 0.0, %v2222
    %v2224 = vpop.f32.mrf.mxu0
    %v2225 = vadd.f32 0.0, %v2224
    %2226 = vmatmul.bf16.gmra.mxu0 %v2086
    %v2227 = vpop.f32.mrf.mxu0
    %v2228 = vadd.f32 0.0, %v2227
    %v2229 = vpop.f32.mrf.mxu0
    %v2230 = vadd.f32 0.0, %v2229
    %2231 = vmatmul.bf16.gmra.mxu0 %v2087
    %v2232 = vpop.f32.mrf.mxu0
    %v2233 = vadd.f32 0.0, %v2232
    %v2234 = vpop.f32.mrf.mxu0
    %v2235 = vadd.f32 0.0, %v2234
    %2236 = vmatmul.bf16.gmra.mxu0 %v2088
    %v2237 = vpop.f32.mrf.mxu0
    %v2238 = vadd.f32 0.0, %v2237
    %v2239 = vpop.f32.mrf.mxu0
    %v2240 = vadd.f32 0.0, %v2239
    %2241 = vdwg.mxu0
    %v2258 = vunpack.c.l.b16 %v2057
    %v2259 = vunpack.c.l.b16 %v2058
    %v2260 = vunpack.c.l.b16 %v2059
    %v2261 = vunpack.c.l.b16 %v2060
    %v2262 = vunpack.c.l.b16 %v2061
    %v2263 = vunpack.c.l.b16 %v2062
    %v2264 = vunpack.c.l.b16 %v2063
    %v2265 = vunpack.c.l.b16 %v2064
    %v2266 = vunpack.c.l.b16 %v2065
    %v2267 = vunpack.c.l.b16 %v2066
    %v2268 = vunpack.c.l.b16 %v2067
    %v2269 = vunpack.c.l.b16 %v2068
    %v2270 = vunpack.c.l.b16 %v2069
    %v2271 = vunpack.c.l.b16 %v2070
    %v2272 = vunpack.c.l.b16 %v2071
    %v2273 = vunpack.c.l.b16 %v2072
    %v2274 = vpack.c.b16 %v2259, %v2258
    %v2275 = vpack.c.b16 %v2261, %v2260
    %v2276 = vpack.c.b16 %v2263, %v2262
    %v2277 = vpack.c.b16 %v2265, %v2264
    %v2278 = vpack.c.b16 %v2267, %v2266
    %v2279 = vpack.c.b16 %v2269, %v2268
    %v2280 = vpack.c.b16 %v2271, %v2270
    %v2281 = vpack.c.b16 %v2273, %v2272
    %2290 = vmatpush.bf16.msra.mxu0 %v2281
    %2291 = vmatpush.bf16.msra.mxu0 %v2280
    %2292 = vmatpush.bf16.msra.mxu0 %v2279
    %2293 = vmatpush.bf16.msra.mxu0 %v2278
    %2294 = vmatpush.bf16.msra.mxu0 %v2277
    %2295 = vmatpush.bf16.msra.mxu0 %v2276
    %2296 = vmatpush.bf16.msra.mxu0 %v2275
    %2297 = vmatpush.bf16.msra.mxu0 %v2274
    %2298 = vmatmul.bf16.gmra.mxu0 %v2041
    %v2299 = vpop.f32.mrf.mxu0
    %v2300 = vadd.f32 %v2163, %v2299
    %v2301 = vpop.f32.mrf.mxu0
    %v2302 = vadd.f32 %v2165, %v2301
    %2303 = vmatmul.bf16.gmra.mxu0 %v2042
    %v2304 = vpop.f32.mrf.mxu0
    %v2305 = vadd.f32 %v2168, %v2304
    %v2306 = vpop.f32.mrf.mxu0
    %v2307 = vadd.f32 %v2170, %v2306
    %2308 = vmatmul.bf16.gmra.mxu0 %v2043
    %v2309 = vpop.f32.mrf.mxu0
    %v2310 = vadd.f32 %v2173, %v2309
    %v2311 = vpop.f32.mrf.mxu0
    %v2312 = vadd.f32 %v2175, %v2311
    %2313 = vmatmul.bf16.gmra.mxu0 %v2044
    %v2314 = vpop.f32.mrf.mxu0
    %v2315 = vadd.f32 %v2178, %v2314
    %v2316 = vpop.f32.mrf.mxu0
    %v2317 = vadd.f32 %v2180, %v2316
    %2318 = vmatmul.bf16.gmra.mxu0 %v2045
    %v2319 = vpop.f32.mrf.mxu0
    %v2320 = vadd.f32 %v2183, %v2319
    %v2321 = vpop.f32.mrf.mxu0
    %v2322 = vadd.f32 %v2185, %v2321
    %2323 = vmatmul.bf16.gmra.mxu0 %v2046
    %v2324 = vpop.f32.mrf.mxu0
    %v2325 = vadd.f32 %v2188, %v2324
    %v2326 = vpop.f32.mrf.mxu0
    %v2327 = vadd.f32 %v2190, %v2326
    %2328 = vmatmul.bf16.gmra.mxu0 %v2047
    %v2329 = vpop.f32.mrf.mxu0
    %v2330 = vadd.f32 %v2193, %v2329
    %v2331 = vpop.f32.mrf.mxu0
    %v2332 = vadd.f32 %v2195, %v2331
    %2333 = vmatmul.bf16.gmra.mxu0 %v2048
    %v2334 = vpop.f32.mrf.mxu0
    %v2335 = vadd.f32 %v2198, %v2334
    %v2336 = vpop.f32.mrf.mxu0
    %v2337 = vadd.f32 %v2200, %v2336
    %2338 = vmatmul.bf16.gmra.mxu0 %v2049
    %v2339 = vpop.f32.mrf.mxu0
    %v2340 = vadd.f32 %v2203, %v2339
    %v2341 = vpop.f32.mrf.mxu0
    %v2342 = vadd.f32 %v2205, %v2341
    %2343 = vmatmul.bf16.gmra.mxu0 %v2050
    %v2344 = vpop.f32.mrf.mxu0
    %v2345 = vadd.f32 %v2208, %v2344
    %v2346 = vpop.f32.mrf.mxu0
    %v2347 = vadd.f32 %v2210, %v2346
    %2348 = vmatmul.bf16.gmra.mxu0 %v2051
    %v2349 = vpop.f32.mrf.mxu0
    %v2350 = vadd.f32 %v2213, %v2349
    %v2351 = vpop.f32.mrf.mxu0
    %v2352 = vadd.f32 %v2215, %v2351
    %2353 = vmatmul.bf16.gmra.mxu0 %v2052
    %v2354 = vpop.f32.mrf.mxu0
    %v2355 = vadd.f32 %v2218, %v2354
    %v2356 = vpop.f32.mrf.mxu0
    %v2357 = vadd.f32 %v2220, %v2356
    %2358 = vmatmul.bf16.gmra.mxu0 %v2053
    %v2359 = vpop.f32.mrf.mxu0
    %v2360 = vadd.f32 %v2223, %v2359
    %v2361 = vpop.f32.mrf.mxu0
    %v2362 = vadd.f32 %v2225, %v2361
    %2363 = vmatmul.bf16.gmra.mxu0 %v2054
    %v2364 = vpop.f32.mrf.mxu0
    %v2365 = vadd.f32 %v2228, %v2364
    %v2366 = vpop.f32.mrf.mxu0
    %v2367 = vadd.f32 %v2230, %v2366
    %2368 = vmatmul.bf16.gmra.mxu0 %v2055
    %v2369 = vpop.f32.mrf.mxu0
    %v2370 = vadd.f32 %v2233, %v2369
    %v2371 = vpop.f32.mrf.mxu0
    %v2372 = vadd.f32 %v2235, %v2371
    %2373 = vmatmul.bf16.gmra.mxu0 %v2056
    %v2374 = vpop.f32.mrf.mxu0
    %v2375 = vadd.f32 %v2238, %v2374
    %v2376 = vpop.f32.mrf.mxu0
    %v2377 = vadd.f32 %v2240, %v2376
    %2378 = vdwg.mxu0
    %v2379 = vld [vmem:[%s8] sm:$0x1]
    %v2381 = vperm.slane %v2379, 0
    %v2383 = vadd.f32 %v2300, %v2381
    %v2384 = vadd.f32 %v2302, %v2381
    %v2385 = vadd.f32 %v2305, %v2381
    %v2386 = vadd.f32 %v2307, %v2381
    %v2387 = vadd.f32 %v2310, %v2381
    %v2388 = vadd.f32 %v2312, %v2381
    %v2389 = vadd.f32 %v2315, %v2381
    %v2390 = vadd.f32 %v2317, %v2381
    %v2391 = vadd.f32 %v2320, %v2381
    %v2392 = vadd.f32 %v2322, %v2381
    %v2393 = vadd.f32 %v2325, %v2381
    %v2394 = vadd.f32 %v2327, %v2381
    %v2395 = vadd.f32 %v2330, %v2381
    %v2396 = vadd.f32 %v2332, %v2381
    %v2397 = vadd.f32 %v2335, %v2381
    %v2398 = vadd.f32 %v2337, %v2381
    %v2399 = vadd.f32 %v2340, %v2381
    %v2400 = vadd.f32 %v2342, %v2381
    %v2401 = vadd.f32 %v2345, %v2381
    %v2402 = vadd.f32 %v2347, %v2381
    %v2403 = vadd.f32 %v2350, %v2381
    %v2404 = vadd.f32 %v2352, %v2381
    %v2405 = vadd.f32 %v2355, %v2381
    %v2406 = vadd.f32 %v2357, %v2381
    %v2407 = vadd.f32 %v2360, %v2381
    %v2408 = vadd.f32 %v2362, %v2381
    %v2409 = vadd.f32 %v2365, %v2381
    %v2410 = vadd.f32 %v2367, %v2381
    %v2411 = vadd.f32 %v2370, %v2381
    %v2412 = vadd.f32 %v2372, %v2381
    %v2413 = vadd.f32 %v2375, %v2381
    %v2414 = vadd.f32 %v2377, %v2381
    %2415 = vst [vmem:[#allocation13] sm:$0xff] %v2383
    %2416 = vst [vmem:[#allocation13 + $0x8] sm:$0xff] %v2384
    %2417 = vst [vmem:[#allocation13 + $0x10] sm:$0xff] %v2385
    %2418 = vst [vmem:[#allocation13 + $0x18] sm:$0xff] %v2386
    %2419 = vst [vmem:[#allocation13 + $0x20] sm:$0xff] %v2387
    %2420 = vst [vmem:[#allocation13 + $0x28] sm:$0xff] %v2388
    %2421 = vst [vmem:[#allocation13 + $0x30] sm:$0xff] %v2389
    %2422 = vst [vmem:[#allocation13 + $0x38] sm:$0xff] %v2390
    %2423 = vst [vmem:[#allocation13 + $0x40] sm:$0xff] %v2391
    %2424 = vst [vmem:[#allocation13 + $0x48] sm:$0xff] %v2392
    %2425 = vst [vmem:[#allocation13 + $0x50] sm:$0xff] %v2393
    %2426 = vst [vmem:[#allocation13 + $0x58] sm:$0xff] %v2394
    %2427 = vst [vmem:[#allocation13 + $0x60] sm:$0xff] %v2395
    %2428 = vst [vmem:[#allocation13 + $0x68] sm:$0xff] %v2396
    %2429 = vst [vmem:[#allocation13 + $0x70] sm:$0xff] %v2397
    %2430 = vst [vmem:[#allocation13 + $0x78] sm:$0xff] %v2398
    %2431 = vst [vmem:[#allocation13 + $0x80] sm:$0xff] %v2399
    %2432 = vst [vmem:[#allocation13 + $0x88] sm:$0xff] %v2400
    %2433 = vst [vmem:[#allocation13 + $0x90] sm:$0xff] %v2401
    %2434 = vst [vmem:[#allocation13 + $0x98] sm:$0xff] %v2402
    %2435 = vst [vmem:[#allocation13 + $0xa0] sm:$0xff] %v2403
    %2436 = vst [vmem:[#allocation13 + $0xa8] sm:$0xff] %v2404
    %2437 = vst [vmem:[#allocation13 + $0xb0] sm:$0xff] %v2405
    %2438 = vst [vmem:[#allocation13 + $0xb8] sm:$0xff] %v2406
    %2439 = vst [vmem:[#allocation13 + $0xc0] sm:$0xff] %v2407
    %2440 = vst [vmem:[#allocation13 + $0xc8] sm:$0xff] %v2408
    %2441 = vst [vmem:[#allocation13 + $0xd0] sm:$0xff] %v2409
    %2442 = vst [vmem:[#allocation13 + $0xd8] sm:$0xff] %v2410
    %2443 = vst [vmem:[#allocation13 + $0xe0] sm:$0xff] %v2411
    %2444 = vst [vmem:[#allocation13 + $0xe8] sm:$0xff] %v2412
    %2445 = vst [vmem:[#allocation13 + $0xf0] sm:$0xff] %v2413
    %2446 = vst [vmem:[#allocation13 + $0xf8] sm:$0xff] %v2414
    // Predicated region
    $region62: #{tpu_custom_call.1} parent=1 // pred_check
      _
    $region63: #{tpu_custom_call.1} parent=1 // pred_check_branch
      %2448 = sbr.rel (0) target = $region65
    $region64: #{tpu_custom_call.1} parent=1 // pred_region
      %2450 = vsyncadd [#allocation4], 0
      %s2451 = sshll.u32 [#allocation13], 4
      %s2452 = int_to_ptr.vmem [resolvable:$true] %s2451
      %s2453 = sshll.u32 %s9, 4
      %s2454 = int_to_ptr.hbm [resolvable:$true] %s2453
      %2459 = dma.vmem_to_hbm [thread:$0]  %s2452, 4096, %s2454, [#allocation4], 128, 128, 8
    $region65: #{tpu_custom_call.1} parent=1 // pred_fallthru
      _
    // Predicated region
    $region66: #{tpu_custom_call.1} parent=1 // pred_check
      _
    $region67: #{tpu_custom_call.1} parent=1 // pred_check_branch
      %2461 = sbr.rel (0) target = $region69
    $region68: #{tpu_custom_call.1} parent=1 // pred_region
      %2463 = dma.done [#allocation4], 4096
    $region69: #{tpu_custom_call.1} parent=1 // pred_fallthru
      _
    %2464 = vsyncpa [#allocation3], 1
    %2465 = vsyncpa [#allocation6], 1
    %2466 = vsyncpa [#allocation9], 1
    %2467 = vsyncpa [#allocation12], 1
    %2468 = vsyncpa [#allocation4], 1

</llo_original>
